<compile_context>
chip_gen: v7x
topology: tpu7x:2x2x1
jax: 0.10.0
libtpu: 0.0.40
codegen_flags: <defaults>
</compile_context>

<pallas_src>
import math
from functools import partial

import jax
import jax.numpy as jnp
from jax.experimental import pallas as pl
from jax.experimental.pallas import tpu as pltpu


def _round_up(x, m):
    return (x + m - 1) // m * m


def _self_attention_kernel(x_ref, w_ref, b_ref, mbias_ref, o_ref, qkv_scr,
                           *, tq, f_pad, exp_dtype):
    """One (batch-block, query-tile) grid step.

    x_ref     : (Bb, S_pad, F_pad)    bf16 input slab (constant over q axis)
    w_ref     : (F_pad, 3*F_pad)      bf16 fused, pre-transposed [Wq*scale | Wk | Wv]
    b_ref     : (1, 3*F_pad)          f32 fused bias [bq*scale | bk | bv]
    mbias_ref : (1, S_pad)            f32 additive key mask (0 valid, -1e9 pad)
    o_ref     : (Bb, tq, F_pad)       f32 output tile (lane-dense)
    qkv_scr   : (Bb, S_pad, 3*F_pad)  bf16 VMEM scratch carrying Q|K|V across q tiles
    """
    qi = pl.program_id(1)
    bb, s_pad, _ = x_ref.shape

    # Fused QKV projection, computed ONCE per batch block (q axis is "arbitrary",
    # so this carried scratch is valid across query tiles).  bf16 MXU operands,
    # f32 accumulation; weights arrive pre-transposed (no in-kernel transpose).
    @pl.when(qi == 0)
    def _():
        x2 = x_ref[...].reshape(bb * s_pad, f_pad)                       # bf16
        qkv = jnp.dot(x2, w_ref[...], preferred_element_type=jnp.float32)
        qkv = qkv + b_ref[...]                                           # f32
        qkv_scr[...] = qkv.reshape(bb, s_pad, 3 * f_pad).astype(jnp.bfloat16)

    row0 = pl.multiple_of(qi * tq, tq)
    q = qkv_scr[:, pl.ds(row0, tq), 0:f_pad]              # (Bb, tq, F_pad) bf16, pre-scaled
    k = qkv_scr[:, :, f_pad:2 * f_pad]                    # (Bb, S_pad, F_pad) bf16
    v = qkv_scr[:, :, 2 * f_pad:3 * f_pad]                # (Bb, S_pad, F_pad) bf16

    # scores = (Q/sqrt(F)) K^T : contract last dims (bf16 operands, f32 accum).
    # TODO(synk): if a per-tile XLU transpose of K shows up in the bundle dump,
    # store K pre-transposed (Bb, F_pad, S_pad) at qi==0 instead.
    s = jnp.einsum("bqf,bkf->bqk", q, k,
                   preferred_element_type=jnp.float32)    # (Bb, tq, S_pad)

    # Additive key-padding bias (same effect as masked_fill(-1e9)); one VPU add.
    s = s + mbias_ref[...].reshape(1, 1, s_pad)

    # Online-style softmax with deferred normalization: normalize the small
    # (Bb, tq, F_pad) output instead of the (Bb, tq, S_pad) probability matrix.
    m = jnp.max(s, axis=-1, keepdims=True)
    e = jnp.exp((s - m).astype(exp_dtype))                # bf16 exp on v6e/v7x, f32 on v5e
    denom = jnp.sum(e.astype(jnp.float32), axis=-1, keepdims=True)
    out = jnp.einsum("bqk,bkf->bqf", e.astype(jnp.bfloat16), v,
                     preferred_element_type=jnp.float32)  # (Bb, tq, F_pad)
    o_ref[...] = (out * pl.reciprocal(denom, approx=True)).astype(o_ref.dtype)


def self_attention(x, wq, bq, wk, bk, wv, bv):
    """x: (B, S, F) f32.  wq/wk/wv: (F, F) nn.Linear weights [out,in]; bq/bk/bv: (F,)."""
    B, S, F = x.shape
    out_dtype = x.dtype

    # Lane-dense / MXU-aligned padding: feature and sequence -> multiples of 128.
    # Zero-padding is exact (padded keys are masked, padded rows/cols stripped).
    F_pad = _round_up(F, 128)
    S_pad = _round_up(S, 128)
    scale = 1.0 / math.sqrt(float(F))

    # Pre-transpose + fuse the three projections ONCE in the wrapper, folding the
    # 1/sqrt(F) scale into Wq / bq (zero runtime cost, removes a per-tile multiply):
    #   qkv = x @ [Wq^T*s | Wk^T | Wv^T] + [bq*s | bk | bv]
    def pad_wt(w, sc=1.0):  # (F_out, F_in) -> transposed & zero-padded (F_pad_in, F_pad_out)
        return jnp.pad(w.T * sc, ((0, F_pad - F), (0, F_pad - F)))

    def pad_b(b, sc=1.0):
        return jnp.pad((b * sc).reshape(1, F), ((0, 0), (0, F_pad - F)))

    w_qkv = jnp.concatenate([pad_wt(wq, scale), pad_wt(wk), pad_wt(wv)],
                            axis=1).astype(jnp.bfloat16)                  # (F_pad, 3F_pad)
    b_qkv = jnp.concatenate([pad_b(bq, scale), pad_b(bk), pad_b(bv)],
                            axis=1).astype(jnp.float32)                   # (1, 3F_pad)

    # Additive key mask row: 0 for valid keys, -1e9 for sequence padding.
    mbias = jnp.where(jnp.arange(S_pad) < S, 0.0, -1e9).astype(jnp.float32).reshape(1, S_pad)

    # Query tile: multiple of 128 (MXU/lane aligned), dividing S_pad exactly.
    tq = min(S_pad, 512)
    while S_pad % tq:
        tq -= 128
    n_q = S_pad // tq

    # ---- Generation-aware sizing --------------------------------------------
    try:
        vmem_cap = int(pltpu.get_tpu_info().vmem_capacity_bytes)
    except Exception:
        vmem_cap = 64 * 1024 * 1024        # unknown -> assume v7x-class (conservative)
    try:
        kind = jax.devices()[0].device_kind.lower()
    except Exception:
        kind = ""
    small_vmem = vmem_cap <= 80 * 1024 * 1024            # v7x-class: 64 MiB / TensorCore
    use_bf16_exp = ("v6" in kind) or ("v7" in kind) or ("tpu7" in kind)  # v5e EUP has no bf16

    if small_vmem:
        budget = 24 * 1024 * 1024          # working-set target per TC
        vmem_limit_cap = 48 * 1024 * 1024  # leave headroom below 64 MiB physical
        min_tiles = 2                      # keep both v7x TensorCores fed
    else:
        budget = 72 * 1024 * 1024          # v5e/v6e: 128 MiB VMEM, single TC
        vmem_limit_cap = 100 * 1024 * 1024
        min_tiles = 1

    # Batch block sizing (cdiv + zero-pad: no divisor requirement, prime B ok).
    def vmem_bytes(bb, w_bufs):
        return (2 * bb * S_pad * F_pad * 2                     # x slab (bf16, double-buffered)
                + 2 * bb * tq * F_pad * 4                      # out tile (f32, double-buffered)
                + w_bufs * (3 * F_pad * F_pad * 2              # fused bf16 weights
                            + 3 * F_pad * 4 + S_pad * 4)       # f32 bias + mask row
                + 3 * bb * S_pad * F_pad * 2                   # bf16 QKV scratch
                + 4 * bb * tq * S_pad * 4)                     # scores / softmax temporaries

    fits = [c for c in range(1, B + 1)
            if vmem_bytes(c, 2) <= budget and pl.cdiv(B, c) >= min(min_tiles, B)]
    if fits:
        # Fewest grid batch-steps, then least batch padding, then largest block.
        Bb = min(fits, key=lambda c: (pl.cdiv(B, c), pl.cdiv(B, c) * c, -c))
    else:
        Bb = 1
    B_pad = pl.cdiv(B, Bb) * Bb

    vmem_limit = int(min(max(2 * vmem_bytes(Bb, 2), 32 * 1024 * 1024), vmem_limit_cap))

    x_p = jnp.pad(x, ((0, B_pad - B), (0, S_pad - S), (0, F_pad - F))).astype(jnp.bfloat16)

    kernel = partial(_self_attention_kernel, tq=tq, f_pad=F_pad,
                     exp_dtype=jnp.bfloat16 if use_bf16_exp else jnp.float32)

    cost = pl.CostEstimate(
        flops=int(2 * B * (3 * S * F * F + 2 * S * S * F)),
        transcendentals=int(B * S * S),
        bytes_accessed=int(2 * B * S * F + 4 * B * S * F + 2 * 3 * F * F),
    )

    # TODO(synk): optional user-supplied `mask` argument of the PyTorch module is
    # not wired in; the reference forward is exercised with mask=None.
    # TODO(synk): for very long sequences on v7x (64 MiB VMEM) the resident-KV
    # design should be replaced by a flash-style KV grid axis with m/l/acc scratch.

    def build(single_buffer_invariants):
        inv_kw = {"pipeline_mode": pl.Buffered(1)} if single_buffer_invariants else {}
        w_spec = pl.BlockSpec((F_pad, 3 * F_pad), lambda b, q: (0, 0), **inv_kw)
        b_spec = pl.BlockSpec((1, 3 * F_pad), lambda b, q: (0, 0), **inv_kw)
        m_spec = pl.BlockSpec((1, S_pad), lambda b, q: (0, 0), **inv_kw)
        return pl.pallas_call(
            kernel,
            out_shape=jax.ShapeDtypeStruct((B_pad, S_pad, F_pad), out_dtype),
            grid_spec=pltpu.PrefetchScalarGridSpec(
                num_scalar_prefetch=0,
                grid=(B_pad // Bb, n_q),
                in_specs=[
                    pl.BlockSpec((Bb, S_pad, F_pad), lambda b, q: (b, 0, 0)),  # x slab
                    w_spec,
                    b_spec,
                    m_spec,
                ],
                out_specs=pl.BlockSpec((Bb, tq, F_pad), lambda b, q: (b, q, 0)),
                scratch_shapes=[pltpu.VMEM((Bb, S_pad, 3 * F_pad), jnp.bfloat16)],
            ),
            compiler_params=pltpu.CompilerParams(
                dimension_semantics=("parallel", "arbitrary"),
                vmem_limit_bytes=vmem_limit),
            cost_estimate=cost,
        )

    try:
        out_p = build(True)(x_p, w_qkv, b_qkv, mbias)
    except Exception:
        # pipeline_mode single-buffering not supported on this jax/libtpu: fall back
        # to default double-buffered invariants (only costs a little extra VMEM).
        out_p = build(False)(x_p, w_qkv, b_qkv, mbias)

    # Strip batch/sequence/feature padding.
    return out_p[:B, :S, :F]


def _reference(x, wq, bq, wk, bk, wv, bv):
    F = x.shape[-1]
    q = x @ wq.T + bq
    k = x @ wk.T + bk
    v = x @ wv.T + bv
    scores = jnp.einsum("bqf,bkf->bqk", q, k) / jnp.sqrt(jnp.float32(F))
    attn = jax.nn.softmax(scores, axis=-1)
    return jnp.einsum("bqk,bkf->bqf", attn, v)


if __name__ == "__main__":
    key = jax.random.PRNGKey(0)

    def make_case(case_key, B, S, F):
        kx, kq, kbq, kk, kbk, kv, kbv = jax.random.split(case_key, 7)
        bound = 1.0 / math.sqrt(F)  # nn.Linear default init range
        x = jax.random.normal(kx, (B, S, F), dtype=jnp.float32)
        wq = jax.random.uniform(kq, (F, F), jnp.float32, -bound, bound)
        bq = jax.random.uniform(kbq, (F,), jnp.float32, -bound, bound)
        wk = jax.random.uniform(kk, (F, F), jnp.float32, -bound, bound)
        bk = jax.random.uniform(kbk, (F,), jnp.float32, -bound, bound)
        wv = jax.random.uniform(kv, (F, F), jnp.float32, -bound, bound)
        bv = jax.random.uniform(kbv, (F,), jnp.float32, -bound, bound)
        return x, wq, bq, wk, bk, wv, bv

    k1, k2 = jax.random.split(key)

    # Tolerance reflects bf16 MXU operands (x/W/QKV/probabilities rounded to
    # bf16, f32 accumulation) plus the approximate EUP reciprocal; a broken
    # kernel would be off by O(1), so this still catches real bugs.
    ATOL = RTOL = 5e-2

    # Case 1: nominal small shape (batch=2, seq=8, feature=32) — exercises
    # sequence padding (S_pad=128) and the additive key-mask path.
    args1 = make_case(k1, 2, 8, 32)
    out1 = jax.block_until_ready(self_attention(*args1))
    ref1 = _reference(*args1)
    assert out1.shape == (2, 8, 32)
    assert jnp.allclose(out1, ref1, atol=ATOL, rtol=RTOL), "case1 mismatch vs reference"

    # Case 2: batch without a "nice" factorization and S not a multiple of 8.
    args2 = make_case(k2, 3, 5, 32)
    out2 = jax.block_until_ready(self_attention(*args2))
    ref2 = _reference(*args2)
    assert out2.shape == (3, 5, 32)
    assert jnp.allclose(out2, ref2, atol=ATOL, rtol=RTOL), "case2 mismatch vs reference"

    print("KERNEL_OK")
</pallas_src>

<mosaic_0001>
module attributes {stable_mosaic.version = 11 : i64} {
  func.func @_self_attention_kernel(%arg0: i32, %arg1: i32, %arg2: memref<1x128x128xbf16, #tpu.memory_space<vmem>>, %arg3: memref<128x384xbf16, #tpu.memory_space<vmem>>, %arg4: memref<1x384xf32, #tpu.memory_space<vmem>>, %arg5: memref<1x128xf32, #tpu.memory_space<vmem>>, %arg6: memref<1x128x128xf32, #tpu.memory_space<vmem>>, %arg7: memref<1x128x384xbf16, #tpu.memory_space<vmem>>) attributes {dimension_semantics = [#tpu.dimension_semantics<parallel>, #tpu.dimension_semantics<arbitrary>], iteration_bounds = array<i64: 2, 1>, scalar_prefetch = 0 : i64, scratch_operands = 1 : i64, tpu.core_type = #tpu.core_type<tc>, window_params = [{transform_indices = @transform_0, window_bounds = array<i64: 1, 128, 128>}, {pipeline_mode = #tpu.pipeline_mode<synchronous>, transform_indices = @transform_1, window_bounds = array<i64: 128, 384>}, {pipeline_mode = #tpu.pipeline_mode<synchronous>, transform_indices = @transform_2, window_bounds = array<i64: 1, 384>}, {pipeline_mode = #tpu.pipeline_mode<synchronous>, transform_indices = @transform_3, window_bounds = array<i64: 1, 128>}, {transform_indices = @transform_4, window_bounds = array<i64: 1, 128, 128>}]} {
    %c0_i32 = arith.constant 0 : i32
    %0 = arith.cmpi eq, %arg1, %c0_i32 : i32
    %1 = arith.extui %0 : i1 to i32
    %c0_i32_0 = arith.constant 0 : i32
    %2 = arith.cmpi ne, %1, %c0_i32_0 : i32
    scf.if %2 {
      %c0_14 = arith.constant 0 : index
      %c0_15 = arith.constant 0 : index
      %c0_16 = arith.constant 0 : index
      %27 = vector.load %arg2[%c0_14, %c0_15, %c0_16] : memref<1x128x128xbf16, #tpu.memory_space<vmem>>, vector<1x128x128xbf16>
      %28 = vector.shape_cast %27 : vector<1x128x128xbf16> to vector<128x128xbf16>
      %c0_17 = arith.constant 0 : index
      %c0_18 = arith.constant 0 : index
      %29 = vector.load %arg3[%c0_17, %c0_18] : memref<128x384xbf16, #tpu.memory_space<vmem>>, vector<128x384xbf16>
      %cst_19 = arith.constant dense<0.000000e+00> : vector<128x384xf32>
      %30 = tpu.matmul %28, %29, %cst_19 {dimension_numbers = #tpu.dot_dimension_numbers<[1], [0], [0], [1], [0, 0, 1, 1], [], []>} : vector<128x128xbf16>, vector<128x384xbf16>, vector<128x384xf32> -> vector<128x384xf32>
      %c0_20 = arith.constant 0 : index
      %c0_21 = arith.constant 0 : index
      %31 = vector.load %arg4[%c0_20, %c0_21] : memref<1x384xf32, #tpu.memory_space<vmem>>, vector<1x384xf32>
      %32 = vector.broadcast %31 : vector<1x384xf32> to vector<128x384xf32>
      %33 = arith.addf %30, %32 : vector<128x384xf32>
      %34 = vector.shape_cast %33 : vector<128x384xf32> to vector<1x128x384xf32>
      %35 = arith.truncf %34 : vector<1x128x384xf32> to vector<1x128x384xbf16>
      %c0_22 = arith.constant 0 : index
      %c0_23 = arith.constant 0 : index
      %c0_24 = arith.constant 0 : index
      %36 = vector.load %arg7[%c0_22, %c0_23, %c0_24] : memref<1x128x384xbf16, #tpu.memory_space<vmem>>, vector<1x128x384xbf16>
      tpu.vector_store %arg7[%c0_22, %c0_23, %c0_24], %35 {strides = array<i32>} : memref<1x128x384xbf16, #tpu.memory_space<vmem>>, vector<1x128x384xbf16>,
    } else {
    }
    %c128_i32 = arith.constant 128 : i32
    %3 = arith.muli %arg1, %c128_i32 : i32
    %4 = tpu.assume_multiple %3, 128 : i32
    %c0 = arith.constant 0 : index
    %5 = arith.index_cast %4 : i32 to index
    %c0_1 = arith.constant 0 : index
    %6 = vector.load %arg7[%c0, %5, %c0_1] : memref<1x128x384xbf16, #tpu.memory_space<vmem>>, vector<1x128x128xbf16>
    %c0_2 = arith.constant 0 : index
    %c0_3 = arith.constant 0 : index
    %c128 = arith.constant 128 : index
    %7 = vector.load %arg7[%c0_2, %c0_3, %c128] : memref<1x128x384xbf16, #tpu.memory_space<vmem>>, vector<1x128x128xbf16>
    %c0_4 = arith.constant 0 : index
    %c0_5 = arith.constant 0 : index
    %c256 = arith.constant 256 : index
    %8 = vector.load %arg7[%c0_4, %c0_5, %c256] : memref<1x128x384xbf16, #tpu.memory_space<vmem>>, vector<1x128x128xbf16>
    "tpu.trace_start"() <{level = 10 : i32, message = "bqf,bkf->bqk"}> : () -> ()
    %cst = arith.constant dense<0.000000e+00> : vector<1x128x128xf32>
    %9 = tpu.matmul %6, %7, %cst {dimension_numbers = #tpu.dot_dimension_numbers<[2], [2], [1], [1], [0, 0, 0, 1, 1, 1], [0], [0]>} : vector<1x128x128xbf16>, vector<1x128x128xbf16>, vector<1x128x128xf32> -> vector<1x128x128xf32>
    "tpu.trace_stop"() : () -> ()
    %c0_6 = arith.constant 0 : index
    %c0_7 = arith.constant 0 : index
    %10 = vector.load %arg5[%c0_6, %c0_7] : memref<1x128xf32, #tpu.memory_space<vmem>>, vector<1x128xf32>
    %11 = vector.shape_cast %10 : vector<1x128xf32> to vector<1x1x128xf32>
    %12 = vector.broadcast %11 : vector<1x1x128xf32> to vector<1x128x128xf32>
    %13 = arith.addf %9, %12 : vector<1x128x128xf32>
    %cst_8 = arith.constant dense<0xFF800000> : vector<1x128xf32>
    %14 = vector.multi_reduction <maximumf>, %13, %cst_8 [2] : vector<1x128x128xf32> to vector<1x128xf32>
    %15 = vector.shape_cast %14 : vector<1x128xf32> to vector<1x128x1xf32>
    %16 = vector.broadcast %15 : vector<1x128x1xf32> to vector<1x128x128xf32>
    %17 = arith.subf %13, %16 : vector<1x128x128xf32>
    %18 = math.exp %17 : vector<1x128x128xf32>
    %cst_9 = arith.constant dense<0.000000e+00> : vector<1x128xf32>
    %19 = vector.multi_reduction <add>, %18, %cst_9 [2] : vector<1x128x128xf32> to vector<1x128xf32>
    %20 = vector.shape_cast %19 : vector<1x128xf32> to vector<1x128x1xf32>
    %21 = arith.truncf %18 : vector<1x128x128xf32> to vector<1x128x128xbf16>
    "tpu.trace_start"() <{level = 10 : i32, message = "bqk,bkf->bqf"}> : () -> ()
    %cst_10 = arith.constant dense<0.000000e+00> : vector<1x128x128xf32>
    %22 = tpu.matmul %21, %8, %cst_10 {dimension_numbers = #tpu.dot_dimension_numbers<[2], [1], [1], [2], [0, 0, 0, 1, 1, 2], [0], [0]>} : vector<1x128x128xbf16>, vector<1x128x128xbf16>, vector<1x128x128xf32> -> vector<1x128x128xf32>
    "tpu.trace_stop"() : () -> ()
    %23 = tpu.reciprocal %20 {approx = true} : vector<1x128x1xf32> -> vector<1x128x1xf32>
    %24 = vector.broadcast %23 : vector<1x128x1xf32> to vector<1x128x128xf32>
    %25 = arith.mulf %22, %24 : vector<1x128x128xf32>
    %c0_11 = arith.constant 0 : index
    %c0_12 = arith.constant 0 : index
    %c0_13 = arith.constant 0 : index
    %26 = vector.load %arg6[%c0_11, %c0_12, %c0_13] : memref<1x128x128xf32, #tpu.memory_space<vmem>>, vector<1x128x128xf32>
    tpu.vector_store %arg6[%c0_11, %c0_12, %c0_13], %25 {strides = array<i32>} : memref<1x128x128xf32, #tpu.memory_space<vmem>>, vector<1x128x128xf32>,
    return
  }
  func.func @transform_0(%arg0: i32, %arg1: i32) -> (i32, i32, i32) {
    %c0_i32 = arith.constant 0 : i32
    %c0_i32_0 = arith.constant 0 : i32
    %c0_i32_1 = arith.constant 0 : i32
    return %arg0, %c0_i32, %c0_i32_0 : i32, i32, i32
  }
  func.func @transform_1(%arg0: i32, %arg1: i32) -> (i32, i32) {
    %c0_i32 = arith.constant 0 : i32
    %c0_i32_0 = arith.constant 0 : i32
    %c0_i32_1 = arith.constant 0 : i32
    return %c0_i32, %c0_i32_0 : i32, i32
  }
  func.func @transform_2(%arg0: i32, %arg1: i32) -> (i32, i32) {
    %c0_i32 = arith.constant 0 : i32
    %c0_i32_0 = arith.constant 0 : i32
    %c0_i32_1 = arith.constant 0 : i32
    return %c0_i32, %c0_i32_0 : i32, i32
  }
  func.func @transform_3(%arg0: i32, %arg1: i32) -> (i32, i32) {
    %c0_i32 = arith.constant 0 : i32
    %c0_i32_0 = arith.constant 0 : i32
    %c0_i32_1 = arith.constant 0 : i32
    return %c0_i32, %c0_i32_0 : i32, i32
  }
  func.func @transform_4(%arg0: i32, %arg1: i32) -> (i32, i32, i32) {
    %c0_i32 = arith.constant 0 : i32
    %c0_i32_0 = arith.constant 0 : i32
    return %arg0, %arg1, %c0_i32 : i32, i32, i32
  }
}

module attributes {stable_mosaic.version = 11 : i64} {
  func.func @_self_attention_kernel(%arg0: i32, %arg1: i32, %arg2: memref<1x128x128xbf16, #tpu.memory_space<vmem>>, %arg3: memref<128x384xbf16, #tpu.memory_space<vmem>>, %arg4: memref<1x384xf32, #tpu.memory_space<vmem>>, %arg5: memref<1x128xf32, #tpu.memory_space<vmem>>, %arg6: memref<1x128x128xf32, #tpu.memory_space<vmem>>, %arg7: memref<1x128x384xbf16, #tpu.memory_space<vmem>>) attributes {dimension_semantics = [#tpu.dimension_semantics<parallel>, #tpu.dimension_semantics<arbitrary>], iteration_bounds = array<i64: 2, 1>, scalar_prefetch = 0 : i64, scratch_operands = 1 : i64, tpu.core_type = #tpu.core_type<tc>, window_params = [{transform_indices = @transform_0, window_bounds = array<i64: 1, 128, 128>}, {pipeline_mode = #tpu.pipeline_mode<synchronous>, transform_indices = @transform_1, window_bounds = array<i64: 128, 384>}, {pipeline_mode = #tpu.pipeline_mode<synchronous>, transform_indices = @transform_2, window_bounds = array<i64: 1, 384>}, {pipeline_mode = #tpu.pipeline_mode<synchronous>, transform_indices = @transform_3, window_bounds = array<i64: 1, 128>}, {transform_indices = @transform_4, window_bounds = array<i64: 1, 128, 128>}]} {
    %c0_i32 = arith.constant 0 : i32
    %0 = arith.cmpi eq, %arg1, %c0_i32 : i32
    %1 = arith.extui %0 : i1 to i32
    %c0_i32_0 = arith.constant 0 : i32
    %2 = arith.cmpi ne, %1, %c0_i32_0 : i32
    scf.if %2 {
      %c0_14 = arith.constant 0 : index
      %c0_15 = arith.constant 0 : index
      %c0_16 = arith.constant 0 : index
      %27 = vector.load %arg2[%c0_14, %c0_15, %c0_16] : memref<1x128x128xbf16, #tpu.memory_space<vmem>>, vector<1x128x128xbf16>
      %28 = vector.shape_cast %27 : vector<1x128x128xbf16> to vector<128x128xbf16>
      %c0_17 = arith.constant 0 : index
      %c0_18 = arith.constant 0 : index
      %29 = vector.load %arg3[%c0_17, %c0_18] : memref<128x384xbf16, #tpu.memory_space<vmem>>, vector<128x384xbf16>
      %cst_19 = arith.constant dense<0.000000e+00> : vector<128x384xf32>
      %30 = tpu.matmul %28, %29, %cst_19 {dimension_numbers = #tpu.dot_dimension_numbers<[1], [0], [0], [1], [0, 0, 1, 1], [], []>} : vector<128x128xbf16>, vector<128x384xbf16>, vector<128x384xf32> -> vector<128x384xf32>
      %c0_20 = arith.constant 0 : index
      %c0_21 = arith.constant 0 : index
      %31 = vector.load %arg4[%c0_20, %c0_21] : memref<1x384xf32, #tpu.memory_space<vmem>>, vector<1x384xf32>
      %32 = vector.broadcast %31 : vector<1x384xf32> to vector<128x384xf32>
      %33 = arith.addf %30, %32 : vector<128x384xf32>
      %34 = vector.shape_cast %33 : vector<128x384xf32> to vector<1x128x384xf32>
      %35 = arith.truncf %34 : vector<1x128x384xf32> to vector<1x128x384xbf16>
      %c0_22 = arith.constant 0 : index
      %c0_23 = arith.constant 0 : index
      %c0_24 = arith.constant 0 : index
      %36 = vector.load %arg7[%c0_22, %c0_23, %c0_24] : memref<1x128x384xbf16, #tpu.memory_space<vmem>>, vector<1x128x384xbf16>
      tpu.vector_store %arg7[%c0_22, %c0_23, %c0_24], %35 {strides = array<i32>} : memref<1x128x384xbf16, #tpu.memory_space<vmem>>, vector<1x128x384xbf16>,
    } else {
    }
    %c128_i32 = arith.constant 128 : i32
    %3 = arith.muli %arg1, %c128_i32 : i32
    %4 = tpu.assume_multiple %3, 128 : i32
    %c0 = arith.constant 0 : index
    %5 = arith.index_cast %4 : i32 to index
    %c0_1 = arith.constant 0 : index
    %6 = vector.load %arg7[%c0, %5, %c0_1] : memref<1x128x384xbf16, #tpu.memory_space<vmem>>, vector<1x128x128xbf16>
    %c0_2 = arith.constant 0 : index
    %c0_3 = arith.constant 0 : index
    %c128 = arith.constant 128 : index
    %7 = vector.load %arg7[%c0_2, %c0_3, %c128] : memref<1x128x384xbf16, #tpu.memory_space<vmem>>, vector<1x128x128xbf16>
    %c0_4 = arith.constant 0 : index
    %c0_5 = arith.constant 0 : index
    %c256 = arith.constant 256 : index
    %8 = vector.load %arg7[%c0_4, %c0_5, %c256] : memref<1x128x384xbf16, #tpu.memory_space<vmem>>, vector<1x128x128xbf16>
    "tpu.trace_start"() <{level = 10 : i32, message = "bqf,bkf->bqk"}> : () -> ()
    %cst = arith.constant dense<0.000000e+00> : vector<1x128x128xf32>
    %9 = tpu.matmul %6, %7, %cst {dimension_numbers = #tpu.dot_dimension_numbers<[2], [2], [1], [1], [0, 0, 0, 1, 1, 1], [0], [0]>} : vector<1x128x128xbf16>, vector<1x128x128xbf16>, vector<1x128x128xf32> -> vector<1x128x128xf32>
    "tpu.trace_stop"() : () -> ()
    %c0_6 = arith.constant 0 : index
    %c0_7 = arith.constant 0 : index
    %10 = vector.load %arg5[%c0_6, %c0_7] : memref<1x128xf32, #tpu.memory_space<vmem>>, vector<1x128xf32>
    %11 = vector.shape_cast %10 : vector<1x128xf32> to vector<1x1x128xf32>
    %12 = vector.broadcast %11 : vector<1x1x128xf32> to vector<1x128x128xf32>
    %13 = arith.addf %9, %12 : vector<1x128x128xf32>
    %cst_8 = arith.constant dense<0xFF800000> : vector<1x128xf32>
    %14 = vector.multi_reduction <maximumf>, %13, %cst_8 [2] : vector<1x128x128xf32> to vector<1x128xf32>
    %15 = vector.shape_cast %14 : vector<1x128xf32> to vector<1x128x1xf32>
    %16 = vector.broadcast %15 : vector<1x128x1xf32> to vector<1x128x128xf32>
    %17 = arith.subf %13, %16 : vector<1x128x128xf32>
    %18 = math.exp %17 : vector<1x128x128xf32>
    %cst_9 = arith.constant dense<0.000000e+00> : vector<1x128xf32>
    %19 = vector.multi_reduction <add>, %18, %cst_9 [2] : vector<1x128x128xf32> to vector<1x128xf32>
    %20 = vector.shape_cast %19 : vector<1x128xf32> to vector<1x128x1xf32>
    %21 = arith.truncf %18 : vector<1x128x128xf32> to vector<1x128x128xbf16>
    "tpu.trace_start"() <{level = 10 : i32, message = "bqk,bkf->bqf"}> : () -> ()
    %cst_10 = arith.constant dense<0.000000e+00> : vector<1x128x128xf32>
    %22 = tpu.matmul %21, %8, %cst_10 {dimension_numbers = #tpu.dot_dimension_numbers<[2], [1], [1], [2], [0, 0, 0, 1, 1, 2], [0], [0]>} : vector<1x128x128xbf16>, vector<1x128x128xbf16>, vector<1x128x128xf32> -> vector<1x128x128xf32>
    "tpu.trace_stop"() : () -> ()
    %23 = tpu.reciprocal %20 {approx = true} : vector<1x128x1xf32> -> vector<1x128x1xf32>
    %24 = vector.broadcast %23 : vector<1x128x1xf32> to vector<1x128x128xf32>
    %25 = arith.mulf %22, %24 : vector<1x128x128xf32>
    %c0_11 = arith.constant 0 : index
    %c0_12 = arith.constant 0 : index
    %c0_13 = arith.constant 0 : index
    %26 = vector.load %arg6[%c0_11, %c0_12, %c0_13] : memref<1x128x128xf32, #tpu.memory_space<vmem>>, vector<1x128x128xf32>
    tpu.vector_store %arg6[%c0_11, %c0_12, %c0_13], %25 {strides = array<i32>} : memref<1x128x128xf32, #tpu.memory_space<vmem>>, vector<1x128x128xf32>,
    return
  }
  func.func @transform_0(%arg0: i32, %arg1: i32) -> (i32, i32, i32) {
    %c0_i32 = arith.constant 0 : i32
    %c0_i32_0 = arith.constant 0 : i32
    %c0_i32_1 = arith.constant 0 : i32
    return %arg0, %c0_i32, %c0_i32_0 : i32, i32, i32
  }
  func.func @transform_1(%arg0: i32, %arg1: i32) -> (i32, i32) {
    %c0_i32 = arith.constant 0 : i32
    %c0_i32_0 = arith.constant 0 : i32
    %c0_i32_1 = arith.constant 0 : i32
    return %c0_i32, %c0_i32_0 : i32, i32
  }
  func.func @transform_2(%arg0: i32, %arg1: i32) -> (i32, i32) {
    %c0_i32 = arith.constant 0 : i32
    %c0_i32_0 = arith.constant 0 : i32
    %c0_i32_1 = arith.constant 0 : i32
    return %c0_i32, %c0_i32_0 : i32, i32
  }
  func.func @transform_3(%arg0: i32, %arg1: i32) -> (i32, i32) {
    %c0_i32 = arith.constant 0 : i32
    %c0_i32_0 = arith.constant 0 : i32
    %c0_i32_1 = arith.constant 0 : i32
    return %c0_i32, %c0_i32_0 : i32, i32
  }
  func.func @transform_4(%arg0: i32, %arg1: i32) -> (i32, i32, i32) {
    %c0_i32 = arith.constant 0 : i32
    %c0_i32_0 = arith.constant 0 : i32
    return %arg0, %arg1, %c0_i32 : i32, i32, i32
  }
}

</mosaic_0001>

<llo_original>
// kernel: tpu_custom_call.1
$region0: #{tpu_custom_call.1}
  #allocation0 [shape = 'u32[]', space=smem, size = 0x4, offset = 0x4, fixed_abs, tag = 'smem constant byte address 0x4 - core index']
  #allocation1 [shape = 'u32[144,128]{1,0:T(1,128)}', space=vmem, size = 0x12000, scoped, tag = 'internal scratch']
  #allocation2 [shape = 'bf16[1,128,384]{2,1,0:T(16,128)(2,1)}', space=vmem, size = 0x18000, scoped, tag = 'scratch operand']
  %s0 = inlined_call_operand.hbm [shape: bf16[2,128,128], index: 0, kind: input, shape index: {}]
  %s1 = inlined_call_operand.hbm [shape: bf16[128,384], index: 1, kind: input, shape index: {}]
  %s2 = inlined_call_operand.vmem [shape: f32[1,384], index: 2, kind: input, shape index: {}]
  %s3 = inlined_call_operand.vmem [shape: f32[1,128], index: 3, kind: input, shape index: {}]
  %s4 = inlined_call_operand.hbm [shape: f32[2,128,128], index: 4, kind: output, shape index: {}]
  %s5 = sld [smem:[#allocation0]]
  $region61: #{tpu_custom_call.1} parent=0
    _
  %s7 = ssub.s32 1, %s5
  %s8 = scalar_select 0, %s7, %s5
  $region1: #{tpu_custom_call.1} parent=0
    #allocation3 [shape = 'u8[65536]{0}', space=vmem, size = 0x10000, scoped, tag = 'input window, operand 0']
    #allocation4 [shape = 's32[2]{0}', space=sflag, size = 0x8, scoped, tag = 'scoped memory for tpu_custom_call.1']
    #allocation5 [shape = 's32[2]{0}', space=sflag, size = 0x8, scoped, tag = 'scoped memory for tpu_custom_call.1']
    #allocation6 [shape = 'u8[98304]{0}', space=vmem, size = 0x18000, scoped, tag = 'input window, operand 1, single buffered']
    #allocation7 [shape = 's32[1]{0}', space=sflag, size = 0x4, scoped, tag = 'scoped memory for tpu_custom_call.1']
    #allocation8 [shape = 'u8[131072]{0}', space=vmem, size = 0x20000, scoped, tag = 'output window, operand 0']
    %9 = vsyncpa [#allocation4], 0
    %s10 = scalar_lea.sflag [#allocation4], 1
    %11 = vsyncpa %s10, 0
    %12 = vsyncpa [#allocation7], 0
    %13 = vsyncpa [#allocation5], 0
    %s14 = scalar_lea.sflag [#allocation5], 1
    %15 = vsyncpa %s14, 0
    loop: start=0, step=1, limit=4
    $region2: #{tpu_custom_call.1} parent=1 // loop_pre_header
      _
    $region3: #{tpu_custom_call.1} parent=1 // loop_header
      %s17 = sphi 0, %s21
      %p18 = scmp.ge.s32.totalorder %s17, 4
      %s24 = sphi 0, %s36
      %s25 = sphi 0, %s32
      %s26 = sphi 0, %s24
      %s27 = sphi 0, %s25
      %s28 = sphi 0, %s26
      %s29 = sphi 0, %s27
      %s39 = sphi 0, %s41
      %s42 = sphi 0, %s39
      %s43 = sphi 0, %s42
      %s59 = sphi 0, %s43
      %s63 = sphi 0, %s63
      %s65 = sphi 0, %s63
      %s66 = sphi 0, %s65
      %s80 = sphi 0, %s66
      %s84 = sphi 0, %s84
      %s86 = sphi 0, %s84
      %s87 = sphi 0, %s86
      %s101 = sphi 0, %s87
      %s105 = sphi 0, %s105
      %s107 = sphi 0, %s105
      %s108 = sphi 0, %s107
      %s122 = sphi 0, %s108
      %s130 = sphi 0, %s132
      %s133 = sphi 0, %s130
      %s134 = sphi 0, %s133
      %s150 = sphi 0, %s134
    $region4: #{tpu_custom_call.1} parent=1 // loop_header_branch
      %20 = sbr.rel (%p18) target = $region8
    $region5: #{tpu_custom_call.1} parent=1 // loop_body
      %s22 = ssub.s32 %s17, 1
      %s23 = ssub.s32 %s17, 2
      %s30 = sadd.s32 1, %s25
      %p31 = scmp.ge.s32.totalorder %s30, 1
      %s32 = scalar_select %p31, 0, %s30
      %s33 = sadd.s32 1, %s24
      %s34 = scalar_select %p31, %s33, %s24
      %p35 = scmp.ge.s32.totalorder %s34, 2
      %s36 = scalar_select %p35, 0, %s34
      %s37 = ssub.s32 %s24, %s36
      %p38 = scmp.eq.s32.totalorder %s37, 0
      %s40 = sadd.s32 %s39, 1
      %s41 = scalar_select %p38, %s39, %s40
      %p44 = pneg %p38
      %p45 = scmp.eq.s32.totalorder %s17, 1
      %p46 = por %p44, %p45
      %p47 = scmp.ne.s32.totalorder %s39, %s42
      %p48 = scmp.eq.s32.totalorder %s17, 0
      %p49 = por %p47, %p48
      %p50 = scmp.ne.s32.totalorder %s39, %s42
      %p51 = scmp.eq.s32.totalorder %s22, 1
      %p52 = por %p50, %p51
      %p53 = scmp.ne.s32.totalorder %s42, %s43
      %p54 = scmp.eq.s32.totalorder %s22, 0
      %p55 = por %p53, %p54
      %p56 = scmp.ne.s32.totalorder %s42, %s43
      %p57 = scmp.eq.s32.totalorder %s23, 1
      %p58 = por %p56, %p57
      %p60 = scmp.ne.s32.totalorder %s43, %s59
      %p61 = scmp.eq.s32.totalorder %s23, 0
      %p62 = por %p60, %p61
      %s64 = sadd.s32 %s63, 1
      %p67 = scmp.eq.s32.totalorder %s17, 1
      %p68 = scmp.ne.s32.totalorder %s63, %s65
      %p69 = scmp.eq.s32.totalorder %s17, 0
      %p70 = por %p68, %p69
      %p71 = scmp.ne.s32.totalorder %s63, %s65
      %p72 = scmp.eq.s32.totalorder %s22, 1
      %p73 = por %p71, %p72
      %p74 = scmp.ne.s32.totalorder %s65, %s66
      %p75 = scmp.eq.s32.totalorder %s22, 0
      %p76 = por %p74, %p75
      %p77 = scmp.ne.s32.totalorder %s65, %s66
      %p78 = scmp.eq.s32.totalorder %s23, 1
      %p79 = por %p77, %p78
      %p81 = scmp.ne.s32.totalorder %s66, %s80
      %p82 = scmp.eq.s32.totalorder %s23, 0
      %p83 = por %p81, %p82
      %s85 = sadd.s32 %s84, 1
      %p88 = scmp.eq.s32.totalorder %s17, 1
      %p89 = scmp.ne.s32.totalorder %s84, %s86
      %p90 = scmp.eq.s32.totalorder %s17, 0
      %p91 = por %p89, %p90
      %p92 = scmp.ne.s32.totalorder %s84, %s86
      %p93 = scmp.eq.s32.totalorder %s22, 1
      %p94 = por %p92, %p93
      %p95 = scmp.ne.s32.totalorder %s86, %s87
      %p96 = scmp.eq.s32.totalorder %s22, 0
      %p97 = por %p95, %p96
      %p98 = scmp.ne.s32.totalorder %s86, %s87
      %p99 = scmp.eq.s32.totalorder %s23, 1
      %p100 = por %p98, %p99
      %p102 = scmp.ne.s32.totalorder %s87, %s101
      %p103 = scmp.eq.s32.totalorder %s23, 0
      %p104 = por %p102, %p103
      %s106 = sadd.s32 %s105, 1
      %p109 = scmp.eq.s32.totalorder %s17, 1
      %p110 = scmp.ne.s32.totalorder %s105, %s107
      %p111 = scmp.eq.s32.totalorder %s17, 0
      %p112 = por %p110, %p111
      %p113 = scmp.ne.s32.totalorder %s105, %s107
      %p114 = scmp.eq.s32.totalorder %s22, 1
      %p115 = por %p113, %p114
      %p116 = scmp.ne.s32.totalorder %s107, %s108
      %p117 = scmp.eq.s32.totalorder %s22, 0
      %p118 = por %p116, %p117
      %p119 = scmp.ne.s32.totalorder %s107, %s108
      %p120 = scmp.eq.s32.totalorder %s23, 1
      %p121 = por %p119, %p120
      %p123 = scmp.ne.s32.totalorder %s108, %s122
      %p124 = scmp.eq.s32.totalorder %s23, 0
      %p125 = por %p123, %p124
      %s126 = ssub.s32 %s24, %s36
      %s127 = ssub.s32 %s25, %s32
      %s128 = sor.u32 %s126, %s127
      %p129 = scmp.eq.s32.totalorder %s128, 0
      %s131 = sadd.s32 %s130, 1
      %s132 = scalar_select %p129, %s130, %s131
      %p135 = pneg %p129
      %p136 = scmp.eq.s32.totalorder %s17, 1
      %p137 = por %p135, %p136
      %p138 = scmp.ne.s32.totalorder %s130, %s133
      %p139 = scmp.eq.s32.totalorder %s17, 0
      %p140 = por %p138, %p139
      %p141 = scmp.ne.s32.totalorder %s130, %s133
      %p142 = scmp.eq.s32.totalorder %s22, 1
      %p143 = por %p141, %p142
      %p144 = scmp.ne.s32.totalorder %s133, %s134
      %p145 = scmp.eq.s32.totalorder %s22, 0
      %p146 = por %p144, %p145
      %p147 = scmp.ne.s32.totalorder %s133, %s134
      %p148 = scmp.eq.s32.totalorder %s23, 1
      %p149 = por %p147, %p148
      %p151 = scmp.ne.s32.totalorder %s134, %s150
      %p152 = scmp.eq.s32.totalorder %s23, 0
      %p153 = por %p151, %p152
      %p154 = scmp.le.s32.totalorder 1, %s17
      %p155 = scmp.lt.s32.totalorder %s17, 3
      %p156 = pnand %p154, %p155
      %p157 = pneg %p156
      // Predicated region
      $region9: #{tpu_custom_call.1} parent=5 // pred_check
        _
      $region10: #{tpu_custom_call.1} parent=5 // pred_check_branch
        %159 = sbr.rel (%p156) target = $region12
      $region11: #{tpu_custom_call.1} parent=5 // pred_region
        %s160 = ssub.s32 %s17, 1
        // Predicated region
        $region13: #{tpu_custom_call.1} parent=11 // pred_check
          %p161 = pneg %p76
        $region14: #{tpu_custom_call.1} parent=11 // pred_check_branch
          %163 = sbr.rel (%p161) target = $region16
        $region15: #{tpu_custom_call.1} parent=11 // pred_region
          %s165 = ssub.s32 3072, 3072
          %166 = vsyncadd [#allocation7], %s165
          %s167 = sshll.u32 [#allocation6], 4
          %s168 = int_to_ptr.vmem [resolvable:$true] %s167
          %173 = dma.hbm_to_vmem [thread:$0]  %s1, 3072, %s168, [#allocation7], 192, 192, 12
        $region16: #{tpu_custom_call.1} parent=11 // pred_fallthru
          _
        // Predicated region
        $region17: #{tpu_custom_call.1} parent=11 // pred_check
          %p174 = pneg %p97
        $region18: #{tpu_custom_call.1} parent=11 // pred_check_branch
          %176 = sbr.rel (%p174) target = $region20
        $region19: #{tpu_custom_call.1} parent=11 // pred_region
          _
        $region20: #{tpu_custom_call.1} parent=11 // pred_fallthru
          _
        // Predicated region
        $region21: #{tpu_custom_call.1} parent=11 // pred_check
          %p177 = pneg %p118
        $region22: #{tpu_custom_call.1} parent=11 // pred_check_branch
          %179 = sbr.rel (%p177) target = $region24
        $region23: #{tpu_custom_call.1} parent=11 // pred_region
          _
        $region24: #{tpu_custom_call.1} parent=11 // pred_fallthru
          _
      $region12: #{tpu_custom_call.1} parent=5 // pred_fallthru
        _
      %p180 = scmp.lt.s32.totalorder %s17, 2
      // Predicated region
      $region25: #{tpu_custom_call.1} parent=5 // pred_check
        %p181 = pneg %p180
      $region26: #{tpu_custom_call.1} parent=5 // pred_check_branch
        %183 = sbr.rel (%p181) target = $region28
      $region27: #{tpu_custom_call.1} parent=5 // pred_region
        // Predicated region
        $region29: #{tpu_custom_call.1} parent=27 // pred_check
          %p184 = pneg %p49
        $region30: #{tpu_custom_call.1} parent=27 // pred_check_branch
          %186 = sbr.rel (%p184) target = $region32
        $region31: #{tpu_custom_call.1} parent=27 // pred_region
          %s187 = sand.u32 %s39, 1
          %s188 = scalar_lea.sflag [#allocation4], %s187
          %s189 = sand.u32 %s39, 1
          %s190 = smul.addr %s189, 64
          %s191 = scalar_lea.vmem [#allocation3], %s190
          %s193 = ssub.s32 1024, 1024
          %194 = vsyncadd %s188, %s193
          %s195 = smul.addr %s24, 16
          %s196 = smul.addr %s195, 64
          %s197 = scalar_lea.hbm %s0, %s196
          %s198 = sshll.u32 %s191, 4
          %s199 = int_to_ptr.vmem [resolvable:$true] %s198
          %204 = dma.hbm_to_vmem [thread:$0]  %s197, 1024, %s199, %s188, 64, 64, 4
        $region32: #{tpu_custom_call.1} parent=27 // pred_fallthru
          _
      $region28: #{tpu_custom_call.1} parent=5 // pred_fallthru
        _
      %p205 = scmp.le.s32.totalorder 1, %s17
      %p206 = scmp.lt.s32.totalorder %s17, 3
      %p207 = pnand %p205, %p206
      %p208 = pneg %p207
      // Predicated region
      $region33: #{tpu_custom_call.1} parent=5 // pred_check
        _
      $region34: #{tpu_custom_call.1} parent=5 // pred_check_branch
        %210 = sbr.rel (%p207) target = $region36
      $region35: #{tpu_custom_call.1} parent=5 // pred_region
        %s211 = ssub.s32 %s17, 1
        %s212 = sand.u32 %s42, 1
        %s213 = scalar_lea.sflag [#allocation4], %s212
        %s214 = sand.u32 %s42, 1
        %s215 = smul.addr %s214, 64
        %s216 = scalar_lea.vmem [#allocation3], %s215
        // Predicated region
        $region37: #{tpu_custom_call.1} parent=35 // pred_check
          %p217 = pneg %p55
        $region38: #{tpu_custom_call.1} parent=35 // pred_check_branch
          %219 = sbr.rel (%p217) target = $region40
        $region39: #{tpu_custom_call.1} parent=35 // pred_region
          %220 = dma.done %s213, 1024
        $region40: #{tpu_custom_call.1} parent=35 // pred_fallthru
          _
        // Predicated region
        $region41: #{tpu_custom_call.1} parent=35 // pred_check
          %p221 = pneg %p76
        $region42: #{tpu_custom_call.1} parent=35 // pred_check_branch
          %223 = sbr.rel (%p221) target = $region44
        $region43: #{tpu_custom_call.1} parent=35 // pred_region
          %224 = dma.done [#allocation7], 3072
        $region44: #{tpu_custom_call.1} parent=35 // pred_fallthru
          _
        %s225 = sand.u32 %s42, 1
        %s226 = scalar_lea.sflag [#allocation4], %s225
        %s227 = sand.u32 %s42, 1
        %s228 = smul.addr %s227, 64
        %s229 = scalar_lea.vmem [#allocation3], %s228
        %p230 = pneg %p55
        %p231 = pneg %p52
        %p232 = pneg %p76
        %p233 = pneg %p73
        %p234 = pneg %p97
        %p235 = pneg %p94
        %p236 = pneg %p118
        %p237 = pneg %p115
        %p238 = pneg %p146
        %p239 = pneg %p143
        %s240 = sand.u32 %s133, 1
        %s241 = scalar_lea.sflag [#allocation5], %s240
        %s242 = sand.u32 %s133, 1
        %s243 = smul.addr %s242, 128
        %s244 = scalar_lea.vmem [#allocation8], %s243
        %s245 = smul.u32 16, %s27
        %p247 = scmp.eq.s32.totalorder %s27, 0
        // Predicated region
        $region45: #{tpu_custom_call.1} parent=35 // pred_check
          %p248 = pneg %p247
        $region46: #{tpu_custom_call.1} parent=35 // pred_check_branch
          %250 = sbr.rel (%p248) target = $region48
        $region47: #{tpu_custom_call.1} parent=35 // pred_region
          %v251 = vld [vmem:[%s216] sm:$0xf]
          %v252 = vld [vmem:[%s216 + $0x4] sm:$0xf]
          %v253 = vld [vmem:[%s216 + $0x8] sm:$0xf]
          %v254 = vld [vmem:[%s216 + $0xc] sm:$0xf]
          %v255 = vld [vmem:[%s216 + $0x10] sm:$0xf]
          %v256 = vld [vmem:[%s216 + $0x14] sm:$0xf]
          %v257 = vld [vmem:[%s216 + $0x18] sm:$0xf]
          %v258 = vld [vmem:[%s216 + $0x1c] sm:$0xf]
          %v259 = vld [vmem:[%s216 + $0x20] sm:$0xf]
          %v260 = vld [vmem:[%s216 + $0x24] sm:$0xf]
          %v261 = vld [vmem:[%s216 + $0x28] sm:$0xf]
          %v262 = vld [vmem:[%s216 + $0x2c] sm:$0xf]
          %v263 = vld [vmem:[%s216 + $0x30] sm:$0xf]
          %v264 = vld [vmem:[%s216 + $0x34] sm:$0xf]
          %v265 = vld [vmem:[%s216 + $0x38] sm:$0xf]
          %v266 = vld [vmem:[%s216 + $0x3c] sm:$0xf]
          %v267 = vld [vmem:[#allocation6] sm:$0xff]
          %v268 = vld [vmem:[#allocation6 + $0x8] sm:$0xf]
          %v269 = vld [vmem:[#allocation6 + $0xc] sm:$0xff]
          %v270 = vld [vmem:[#allocation6 + $0x14] sm:$0xf]
          %v271 = vld [vmem:[#allocation6 + $0x18] sm:$0xff]
          %v272 = vld [vmem:[#allocation6 + $0x20] sm:$0xf]
          %v273 = vld [vmem:[#allocation6 + $0x24] sm:$0xff]
          %v274 = vld [vmem:[#allocation6 + $0x2c] sm:$0xf]
          %v275 = vld [vmem:[#allocation6 + $0x30] sm:$0xff]
          %v276 = vld [vmem:[#allocation6 + $0x38] sm:$0xf]
          %v277 = vld [vmem:[#allocation6 + $0x3c] sm:$0xff]
          %v278 = vld [vmem:[#allocation6 + $0x44] sm:$0xf]
          %v279 = vld [vmem:[#allocation6 + $0x48] sm:$0xff]
          %v280 = vld [vmem:[#allocation6 + $0x50] sm:$0xf]
          %v281 = vld [vmem:[#allocation6 + $0x54] sm:$0xff]
          %v282 = vld [vmem:[#allocation6 + $0x5c] sm:$0xf]
          %v283 = vld [vmem:[#allocation6 + $0x60] sm:$0xff]
          %v284 = vld [vmem:[#allocation6 + $0x68] sm:$0xf]
          %v285 = vld [vmem:[#allocation6 + $0x6c] sm:$0xff]
          %v286 = vld [vmem:[#allocation6 + $0x74] sm:$0xf]
          %v287 = vld [vmem:[#allocation6 + $0x78] sm:$0xff]
          %v288 = vld [vmem:[#allocation6 + $0x80] sm:$0xf]
          %v289 = vld [vmem:[#allocation6 + $0x84] sm:$0xff]
          %v290 = vld [vmem:[#allocation6 + $0x8c] sm:$0xf]
          %v291 = vld [vmem:[#allocation6 + $0x90] sm:$0xff]
          %v292 = vld [vmem:[#allocation6 + $0x98] sm:$0xf]
          %v293 = vld [vmem:[#allocation6 + $0x9c] sm:$0xff]
          %v294 = vld [vmem:[#allocation6 + $0xa4] sm:$0xf]
          %v295 = vld [vmem:[#allocation6 + $0xa8] sm:$0xff]
          %v296 = vld [vmem:[#allocation6 + $0xb0] sm:$0xf]
          %v297 = vld [vmem:[#allocation6 + $0xb4] sm:$0xff]
          %v298 = vld [vmem:[#allocation6 + $0xbc] sm:$0xf]
          %v299 = vld [vmem:[%s2] sm:$0x7]
          %v301 = vlaneseq
          %v302 = vshrl.u32 %v301, 7
          %v303 = vsub.s32 0, %v302
          %v304 = vrot.slane %v299, %v303
          %v305 = vlaneseq
          %v306 = vshrl.u32 %v305, 7
          %v307 = vsub.s32 1, %v306
          %v308 = vrot.slane %v299, %v307
          %v309 = vlaneseq
          %v310 = vshrl.u32 %v309, 7
          %v311 = vsub.s32 2, %v310
          %v312 = vrot.slane %v299, %v311
          %v332 = vunpack.c.l.b16 %v251
          %v333 = vunpack.c.l.b16 %v252
          %v334 = vunpack.c.l.b16 %v253
          %v335 = vunpack.c.l.b16 %v254
          %v336 = vunpack.c.l.b16 %v255
          %v337 = vunpack.c.l.b16 %v256
          %v338 = vunpack.c.l.b16 %v257
          %v339 = vunpack.c.l.b16 %v258
          %v340 = vunpack.c.l.b16 %v259
          %v341 = vunpack.c.l.b16 %v260
          %v342 = vunpack.c.l.b16 %v261
          %v343 = vunpack.c.l.b16 %v262
          %v344 = vunpack.c.l.b16 %v263
          %v345 = vunpack.c.l.b16 %v264
          %v346 = vunpack.c.l.b16 %v265
          %v347 = vunpack.c.l.b16 %v266
          %v348 = vpack.c.b16 %v333, %v332
          %v349 = vpack.c.b16 %v335, %v334
          %v350 = vpack.c.b16 %v337, %v336
          %v351 = vpack.c.b16 %v339, %v338
          %v352 = vpack.c.b16 %v341, %v340
          %v353 = vpack.c.b16 %v343, %v342
          %v354 = vpack.c.b16 %v345, %v344
          %v355 = vpack.c.b16 %v347, %v346
          %v396 = vunpack.c.l.b16 %v267
          %v397 = vunpack.c.h.b16 %v267
          %v398 = vunpack.c.l.b16 %v268
          %v399 = vunpack.c.l.b16 %v269
          %v400 = vunpack.c.h.b16 %v269
          %v401 = vunpack.c.l.b16 %v270
          %v402 = vunpack.c.l.b16 %v271
          %v403 = vunpack.c.h.b16 %v271
          %v404 = vunpack.c.l.b16 %v272
          %v405 = vunpack.c.l.b16 %v273
          %v406 = vunpack.c.h.b16 %v273
          %v407 = vunpack.c.l.b16 %v274
          %v408 = vunpack.c.l.b16 %v275
          %v409 = vunpack.c.h.b16 %v275
          %v410 = vunpack.c.l.b16 %v276
          %v411 = vunpack.c.l.b16 %v277
          %v412 = vunpack.c.h.b16 %v277
          %v413 = vunpack.c.l.b16 %v278
          %v414 = vunpack.c.l.b16 %v279
          %v415 = vunpack.c.h.b16 %v279
          %v416 = vunpack.c.l.b16 %v280
          %v417 = vunpack.c.l.b16 %v281
          %v418 = vunpack.c.h.b16 %v281
          %v419 = vunpack.c.l.b16 %v282
          %v420 = vunpack.c.l.b16 %v283
          %v421 = vunpack.c.h.b16 %v283
          %v422 = vunpack.c.l.b16 %v284
          %v423 = vunpack.c.l.b16 %v285
          %v424 = vunpack.c.h.b16 %v285
          %v425 = vunpack.c.l.b16 %v286
          %v426 = vunpack.c.l.b16 %v287
          %v427 = vunpack.c.h.b16 %v287
          %v428 = vunpack.c.l.b16 %v288
          %v429 = vunpack.c.l.b16 %v289
          %v430 = vunpack.c.h.b16 %v289
          %v431 = vunpack.c.l.b16 %v290
          %v432 = vunpack.c.l.b16 %v291
          %v433 = vunpack.c.h.b16 %v291
          %v434 = vunpack.c.l.b16 %v292
          %v435 = vunpack.c.l.b16 %v293
          %v436 = vunpack.c.h.b16 %v293
          %v437 = vunpack.c.l.b16 %v294
          %v438 = vunpack.c.l.b16 %v295
          %v439 = vunpack.c.h.b16 %v295
          %v440 = vunpack.c.l.b16 %v296
          %v441 = vunpack.c.l.b16 %v297
          %v442 = vunpack.c.h.b16 %v297
          %v443 = vunpack.c.l.b16 %v298
          %v444 = vpack.c.b16 %v399, %v396
          %v445 = vpack.c.b16 %v400, %v397
          %v446 = vpack.c.b16 %v401, %v398
          %v447 = vpack.c.b16 %v405, %v402
          %v448 = vpack.c.b16 %v406, %v403
          %v449 = vpack.c.b16 %v407, %v404
          %v450 = vpack.c.b16 %v411, %v408
          %v451 = vpack.c.b16 %v412, %v409
          %v452 = vpack.c.b16 %v413, %v410
          %v453 = vpack.c.b16 %v417, %v414
          %v454 = vpack.c.b16 %v418, %v415
          %v455 = vpack.c.b16 %v419, %v416
          %v456 = vpack.c.b16 %v423, %v420
          %v457 = vpack.c.b16 %v424, %v421
          %v458 = vpack.c.b16 %v425, %v422
          %v459 = vpack.c.b16 %v429, %v426
          %v460 = vpack.c.b16 %v430, %v427
          %v461 = vpack.c.b16 %v431, %v428
          %v462 = vpack.c.b16 %v435, %v432
          %v463 = vpack.c.b16 %v436, %v433
          %v464 = vpack.c.b16 %v437, %v434
          %v465 = vpack.c.b16 %v441, %v438
          %v466 = vpack.c.b16 %v442, %v439
          %v467 = vpack.c.b16 %v443, %v440
          %492 = vmatprep.subr.bf16.mxu0 %v445
          %493 = vmatpush1.bf16.msra.mxu0 %v444
          %494 = vmatprep.subr.bf16.mxu0 %v448
          %495 = vmatpush1.bf16.msra.mxu0 %v447
          %496 = vmatprep.subr.bf16.mxu0 %v451
          %497 = vmatpush1.bf16.msra.mxu0 %v450
          %498 = vmatprep.subr.bf16.mxu0 %v454
          %499 = vmatpush1.bf16.msra.mxu0 %v453
          %500 = vmatprep.subr.bf16.mxu0 %v457
          %501 = vmatpush1.bf16.msra.mxu0 %v456
          %502 = vmatprep.subr.bf16.mxu0 %v460
          %503 = vmatpush1.bf16.msra.mxu0 %v459
          %504 = vmatprep.subr.bf16.mxu0 %v463
          %505 = vmatpush1.bf16.msra.mxu0 %v462
          %506 = vmatprep.subr.bf16.mxu0 %v466
          %507 = vmatpush1.bf16.msra.mxu0 %v465
          %508 = vmatprep.subr.bf16.mxu0 0
          %509 = vmatpush1.bf16.msra.mxu0 0
          %510 = vmatprep.subr.bf16.mxu0 0
          %511 = vmatpush1.bf16.msra.mxu0 0
          %512 = vmatprep.subr.bf16.mxu0 0
          %513 = vmatpush1.bf16.msra.mxu0 0
          %514 = vmatprep.subr.bf16.mxu0 0
          %515 = vmatpush1.bf16.msra.mxu0 0
          %516 = vmatprep.subr.bf16.mxu0 0
          %517 = vmatpush1.bf16.msra.mxu0 0
          %518 = vmatprep.subr.bf16.mxu0 0
          %519 = vmatpush1.bf16.msra.mxu0 0
          %520 = vmatprep.subr.bf16.mxu0 0
          %521 = vmatpush1.bf16.msra.mxu0 0
          %522 = vmatprep.subr.bf16.mxu0 0
          %523 = vmatpush1.bf16.msra.mxu0 0
          %524 = vmatprep.mubr.bf16.mxu0 0
          %525 = vmatmul.mubr.bf16.gmra.mrb[0].mxu0 %v348
          %v526 = vpop.f32.mrb[0].mxu0
          %v527 = vadd.f32 %v304, %v526
          %v528 = vpop.f32.mrb[0].mxu0
          %v529 = vadd.f32 %v308, %v528
          %v530 = vpop.f32.mrb[0].mxu0
          %v531 = vadd.f32 %v304, %v530
          %v532 = vpop.f32.mrb[0].mxu0
          %v533 = vadd.f32 %v308, %v532
          %534 = vmatprep.mubr.bf16.mxu0 0
          %535 = vmatmul.mubr.bf16.gmra.mrb[0].mxu0 %v349
          %v536 = vpop.f32.mrb[0].mxu0
          %v537 = vadd.f32 %v304, %v536
          %v538 = vpop.f32.mrb[0].mxu0
          %v539 = vadd.f32 %v308, %v538
          %v540 = vpop.f32.mrb[0].mxu0
          %v541 = vadd.f32 %v304, %v540
          %v542 = vpop.f32.mrb[0].mxu0
          %v543 = vadd.f32 %v308, %v542
          %544 = vmatprep.mubr.bf16.mxu0 0
          %545 = vmatmul.mubr.bf16.gmra.mrb[0].mxu0 %v350
          %v546 = vpop.f32.mrb[0].mxu0
          %v547 = vadd.f32 %v304, %v546
          %v548 = vpop.f32.mrb[0].mxu0
          %v549 = vadd.f32 %v308, %v548
          %v550 = vpop.f32.mrb[0].mxu0
          %v551 = vadd.f32 %v304, %v550
          %v552 = vpop.f32.mrb[0].mxu0
          %v553 = vadd.f32 %v308, %v552
          %554 = vmatprep.mubr.bf16.mxu0 0
          %555 = vmatmul.mubr.bf16.gmra.mrb[0].mxu0 %v351
          %v556 = vpop.f32.mrb[0].mxu0
          %v557 = vadd.f32 %v304, %v556
          %v558 = vpop.f32.mrb[0].mxu0
          %v559 = vadd.f32 %v308, %v558
          %v560 = vpop.f32.mrb[0].mxu0
          %v561 = vadd.f32 %v304, %v560
          %v562 = vpop.f32.mrb[0].mxu0
          %v563 = vadd.f32 %v308, %v562
          %564 = vmatprep.mubr.bf16.mxu0 0
          %565 = vmatmul.mubr.bf16.gmra.mrb[0].mxu0 %v352
          %v566 = vpop.f32.mrb[0].mxu0
          %v567 = vadd.f32 %v304, %v566
          %v568 = vpop.f32.mrb[0].mxu0
          %v569 = vadd.f32 %v308, %v568
          %v570 = vpop.f32.mrb[0].mxu0
          %v571 = vadd.f32 %v304, %v570
          %v572 = vpop.f32.mrb[0].mxu0
          %v573 = vadd.f32 %v308, %v572
          %574 = vmatprep.mubr.bf16.mxu0 0
          %575 = vmatmul.mubr.bf16.gmra.mrb[0].mxu0 %v353
          %v576 = vpop.f32.mrb[0].mxu0
          %v577 = vadd.f32 %v304, %v576
          %v578 = vpop.f32.mrb[0].mxu0
          %v579 = vadd.f32 %v308, %v578
          %v580 = vpop.f32.mrb[0].mxu0
          %v581 = vadd.f32 %v304, %v580
          %v582 = vpop.f32.mrb[0].mxu0
          %v583 = vadd.f32 %v308, %v582
          %584 = vmatprep.mubr.bf16.mxu0 0
          %585 = vmatmul.mubr.bf16.gmra.mrb[0].mxu0 %v354
          %v586 = vpop.f32.mrb[0].mxu0
          %v587 = vadd.f32 %v304, %v586
          %v588 = vpop.f32.mrb[0].mxu0
          %v589 = vadd.f32 %v308, %v588
          %v590 = vpop.f32.mrb[0].mxu0
          %v591 = vadd.f32 %v304, %v590
          %v592 = vpop.f32.mrb[0].mxu0
          %v593 = vadd.f32 %v308, %v592
          %594 = vmatprep.mubr.bf16.mxu0 0
          %595 = vmatmul.mubr.bf16.gmra.mrb[0].mxu0 %v355
          %v596 = vpop.f32.mrb[0].mxu0
          %v597 = vadd.f32 %v304, %v596
          %v598 = vpop.f32.mrb[0].mxu0
          %v599 = vadd.f32 %v308, %v598
          %v600 = vpop.f32.mrb[0].mxu0
          %v601 = vadd.f32 %v304, %v600
          %v602 = vpop.f32.mrb[0].mxu0
          %v603 = vadd.f32 %v308, %v602
          %604 = vdwg.mxu0
          %605 = vmatprep.subr.bf16.mxu0 0
          %606 = vmatpush1.bf16.msra.mxu0 %v446
          %607 = vmatprep.subr.bf16.mxu0 0
          %608 = vmatpush1.bf16.msra.mxu0 %v449
          %609 = vmatprep.subr.bf16.mxu0 0
          %610 = vmatpush1.bf16.msra.mxu0 %v452
          %611 = vmatprep.subr.bf16.mxu0 0
          %612 = vmatpush1.bf16.msra.mxu0 %v455
          %613 = vmatprep.subr.bf16.mxu0 0
          %614 = vmatpush1.bf16.msra.mxu0 %v458
          %615 = vmatprep.subr.bf16.mxu0 0
          %616 = vmatpush1.bf16.msra.mxu0 %v461
          %617 = vmatprep.subr.bf16.mxu0 0
          %618 = vmatpush1.bf16.msra.mxu0 %v464
          %619 = vmatprep.subr.bf16.mxu0 0
          %620 = vmatpush1.bf16.msra.mxu0 %v467
          %621 = vmatprep.subr.bf16.mxu0 0
          %622 = vmatpush1.bf16.msra.mxu0 0
          %623 = vmatprep.subr.bf16.mxu0 0
          %624 = vmatpush1.bf16.msra.mxu0 0
          %625 = vmatprep.subr.bf16.mxu0 0
          %626 = vmatpush1.bf16.msra.mxu0 0
          %627 = vmatprep.subr.bf16.mxu0 0
          %628 = vmatpush1.bf16.msra.mxu0 0
          %629 = vmatprep.subr.bf16.mxu0 0
          %630 = vmatpush1.bf16.msra.mxu0 0
          %631 = vmatprep.subr.bf16.mxu0 0
          %632 = vmatpush1.bf16.msra.mxu0 0
          %633 = vmatprep.subr.bf16.mxu0 0
          %634 = vmatpush1.bf16.msra.mxu0 0
          %635 = vmatprep.subr.bf16.mxu0 0
          %636 = vmatpush1.bf16.msra.mxu0 0
          %637 = vmatprep.mubr.bf16.mxu0 0
          %638 = vmatmul.mubr.bf16.gmra.mrb[0].mxu0 %v348
          %v639 = vpop.f32.mrb[0].mxu0
          %v640 = vadd.f32 %v312, %v639
          %v641 = vpop.f32.mrb[0].mxu0
          %v642 = vpop.f32.mrb[0].mxu0
          %v643 = vadd.f32 %v312, %v642
          %v644 = vpop.f32.mrb[0].mxu0
          %645 = vmatprep.mubr.bf16.mxu0 0
          %646 = vmatmul.mubr.bf16.gmra.mrb[0].mxu0 %v349
          %v647 = vpop.f32.mrb[0].mxu0
          %v648 = vadd.f32 %v312, %v647
          %v649 = vpop.f32.mrb[0].mxu0
          %v650 = vpop.f32.mrb[0].mxu0
          %v651 = vadd.f32 %v312, %v650
          %v652 = vpop.f32.mrb[0].mxu0
          %653 = vmatprep.mubr.bf16.mxu0 0
          %654 = vmatmul.mubr.bf16.gmra.mrb[0].mxu0 %v350
          %v655 = vpop.f32.mrb[0].mxu0
          %v656 = vadd.f32 %v312, %v655
          %v657 = vpop.f32.mrb[0].mxu0
          %v658 = vpop.f32.mrb[0].mxu0
          %v659 = vadd.f32 %v312, %v658
          %v660 = vpop.f32.mrb[0].mxu0
          %661 = vmatprep.mubr.bf16.mxu0 0
          %662 = vmatmul.mubr.bf16.gmra.mrb[0].mxu0 %v351
          %v663 = vpop.f32.mrb[0].mxu0
          %v664 = vadd.f32 %v312, %v663
          %v665 = vpop.f32.mrb[0].mxu0
          %v666 = vpop.f32.mrb[0].mxu0
          %v667 = vadd.f32 %v312, %v666
          %v668 = vpop.f32.mrb[0].mxu0
          %669 = vmatprep.mubr.bf16.mxu0 0
          %670 = vmatmul.mubr.bf16.gmra.mrb[0].mxu0 %v352
          %v671 = vpop.f32.mrb[0].mxu0
          %v672 = vadd.f32 %v312, %v671
          %v673 = vpop.f32.mrb[0].mxu0
          %v674 = vpop.f32.mrb[0].mxu0
          %v675 = vadd.f32 %v312, %v674
          %v676 = vpop.f32.mrb[0].mxu0
          %677 = vmatprep.mubr.bf16.mxu0 0
          %678 = vmatmul.mubr.bf16.gmra.mrb[0].mxu0 %v353
          %v679 = vpop.f32.mrb[0].mxu0
          %v680 = vadd.f32 %v312, %v679
          %v681 = vpop.f32.mrb[0].mxu0
          %v682 = vpop.f32.mrb[0].mxu0
          %v683 = vadd.f32 %v312, %v682
          %v684 = vpop.f32.mrb[0].mxu0
          %685 = vmatprep.mubr.bf16.mxu0 0
          %686 = vmatmul.mubr.bf16.gmra.mrb[0].mxu0 %v354
          %v687 = vpop.f32.mrb[0].mxu0
          %v688 = vadd.f32 %v312, %v687
          %v689 = vpop.f32.mrb[0].mxu0
          %v690 = vpop.f32.mrb[0].mxu0
          %v691 = vadd.f32 %v312, %v690
          %v692 = vpop.f32.mrb[0].mxu0
          %693 = vmatprep.mubr.bf16.mxu0 0
          %694 = vmatmul.mubr.bf16.gmra.mrb[0].mxu0 %v355
          %v695 = vpop.f32.mrb[0].mxu0
          %v696 = vadd.f32 %v312, %v695
          %v697 = vpop.f32.mrb[0].mxu0
          %v698 = vpop.f32.mrb[0].mxu0
          %v699 = vadd.f32 %v312, %v698
          %v700 = vpop.f32.mrb[0].mxu0
          %701 = vdwg.mxu0
          %v702 = vpack.c.bf16 %v531, %v527
          %v703 = vpack.c.bf16 %v533, %v529
          %v704 = vpack.c.bf16 %v643, %v640
          %v705 = vpack.c.bf16 %v541, %v537
          %v706 = vpack.c.bf16 %v543, %v539
          %v707 = vpack.c.bf16 %v651, %v648
          %v708 = vpack.c.bf16 %v551, %v547
          %v709 = vpack.c.bf16 %v553, %v549
          %v710 = vpack.c.bf16 %v659, %v656
          %v711 = vpack.c.bf16 %v561, %v557
          %v712 = vpack.c.bf16 %v563, %v559
          %v713 = vpack.c.bf16 %v667, %v664
          %v714 = vpack.c.bf16 %v571, %v567
          %v715 = vpack.c.bf16 %v573, %v569
          %v716 = vpack.c.bf16 %v675, %v672
          %v717 = vpack.c.bf16 %v581, %v577
          %v718 = vpack.c.bf16 %v583, %v579
          %v719 = vpack.c.bf16 %v683, %v680
          %v720 = vpack.c.bf16 %v591, %v587
          %v721 = vpack.c.bf16 %v593, %v589
          %v722 = vpack.c.bf16 %v691, %v688
          %v723 = vpack.c.bf16 %v601, %v597
          %v724 = vpack.c.bf16 %v603, %v599
          %v725 = vpack.c.bf16 %v699, %v696
          %726 = vst [vmem:[#allocation2] sm:$0xff] %v702
          %727 = vst [vmem:[#allocation2 + $0x8] sm:$0xff] %v703
          %728 = vst [vmem:[#allocation2 + $0x10] sm:$0xff] %v704
          %729 = vst [vmem:[#allocation2 + $0x18] sm:$0xff] %v705
          %730 = vst [vmem:[#allocation2 + $0x20] sm:$0xff] %v706
          %731 = vst [vmem:[#allocation2 + $0x28] sm:$0xff] %v707
          %732 = vst [vmem:[#allocation2 + $0x30] sm:$0xff] %v708
          %733 = vst [vmem:[#allocation2 + $0x38] sm:$0xff] %v709
          %734 = vst [vmem:[#allocation2 + $0x40] sm:$0xff] %v710
          %735 = vst [vmem:[#allocation2 + $0x48] sm:$0xff] %v711
          %736 = vst [vmem:[#allocation2 + $0x50] sm:$0xff] %v712
          %737 = vst [vmem:[#allocation2 + $0x58] sm:$0xff] %v713
          %738 = vst [vmem:[#allocation2 + $0x60] sm:$0xff] %v714
          %739 = vst [vmem:[#allocation2 + $0x68] sm:$0xff] %v715
          %740 = vst [vmem:[#allocation2 + $0x70] sm:$0xff] %v716
          %741 = vst [vmem:[#allocation2 + $0x78] sm:$0xff] %v717
          %742 = vst [vmem:[#allocation2 + $0x80] sm:$0xff] %v718
          %743 = vst [vmem:[#allocation2 + $0x88] sm:$0xff] %v719
          %744 = vst [vmem:[#allocation2 + $0x90] sm:$0xff] %v720
          %745 = vst [vmem:[#allocation2 + $0x98] sm:$0xff] %v721
          %746 = vst [vmem:[#allocation2 + $0xa0] sm:$0xff] %v722
          %747 = vst [vmem:[#allocation2 + $0xa8] sm:$0xff] %v723
          %748 = vst [vmem:[#allocation2 + $0xb0] sm:$0xff] %v724
          %749 = vst [vmem:[#allocation2 + $0xb8] sm:$0xff] %v725
        $region48: #{tpu_custom_call.1} parent=35 // pred_fallthru
          _
        %s750 = smul.u32 %s27, 128
        %s751 = sshra.s32 %s750, 4
        %s752 = sand.u32 %s750, 15
        %s753 = smul.u32 %s751, 3
        %s754 = smul.addr %s753, 8
        %s755 = scalar_lea.vmem [#allocation2], %s754
        %v756 = vld [vmem:[%s755] sm:$0xff]
        %v757 = vld [vmem:[%s755 + $0x18] sm:$0xff]
        %v758 = vld [vmem:[%s755 + $0x30] sm:$0xff]
        %v759 = vld [vmem:[%s755 + $0x48] sm:$0xff]
        %v760 = vld [vmem:[%s755 + $0x60] sm:$0xff]
        %v761 = vld [vmem:[%s755 + $0x78] sm:$0xff]
        %v762 = vld [vmem:[%s755 + $0x90] sm:$0xff]
        %v763 = vld [vmem:[%s755 + $0xa8] sm:$0xff]
        %v764 = vld [vmem:[#allocation2 + $0x8] sm:$0xff]
        %v765 = vld [vmem:[#allocation2 + $0x20] sm:$0xff]
        %v766 = vld [vmem:[#allocation2 + $0x38] sm:$0xff]
        %v767 = vld [vmem:[#allocation2 + $0x50] sm:$0xff]
        %v768 = vld [vmem:[#allocation2 + $0x68] sm:$0xff]
        %v769 = vld [vmem:[#allocation2 + $0x80] sm:$0xff]
        %v770 = vld [vmem:[#allocation2 + $0x98] sm:$0xff]
        %v771 = vld [vmem:[#allocation2 + $0xb0] sm:$0xff]
        %v772 = vld [vmem:[#allocation2 + $0x10] sm:$0xff]
        %v773 = vld [vmem:[#allocation2 + $0x28] sm:$0xff]
        %v774 = vld [vmem:[#allocation2 + $0x40] sm:$0xff]
        %v775 = vld [vmem:[#allocation2 + $0x58] sm:$0xff]
        %v776 = vld [vmem:[#allocation2 + $0x70] sm:$0xff]
        %v777 = vld [vmem:[#allocation2 + $0x88] sm:$0xff]
        %v778 = vld [vmem:[#allocation2 + $0xa0] sm:$0xff]
        %v779 = vld [vmem:[#allocation2 + $0xb8] sm:$0xff]
        %v780 = vld [vmem:[%s3] sm:$0x1]
        %v782 = vlaneseq
        %v783 = vshrl.u32 %v782, 7
        %v784 = vsub.s32 0, %v783
        %v785 = vrot.slane %v780, %v784
        %787 = vmatprep.subr.bf16.mxu0 0
        %788 = vmatpush1.bf16.xpose.msra.mxu0 %v764
        %789 = vmatprep.subr.bf16.mxu0 0
        %790 = vmatpush1.bf16.xpose.msra.mxu0 %v765
        %791 = vmatprep.subr.bf16.mxu0 0
        %792 = vmatpush1.bf16.xpose.msra.mxu0 %v766
        %793 = vmatprep.subr.bf16.mxu0 0
        %794 = vmatpush1.bf16.xpose.msra.mxu0 %v767
        %795 = vmatprep.subr.bf16.mxu0 0
        %796 = vmatpush1.bf16.xpose.msra.mxu0 %v768
        %797 = vmatprep.subr.bf16.mxu0 0
        %798 = vmatpush1.bf16.xpose.msra.mxu0 %v769
        %799 = vmatprep.subr.bf16.mxu0 0
        %800 = vmatpush1.bf16.xpose.msra.mxu0 %v770
        %801 = vmatprep.subr.bf16.mxu0 0
        %802 = vmatpush1.bf16.xpose.msra.mxu0 %v771
        %803 = vmatprep.subr.bf16.mxu0 0
        %804 = vmatpush1.bf16.xpose.msra.mxu0 0
        %805 = vmatprep.subr.bf16.mxu0 0
        %806 = vmatpush1.bf16.xpose.msra.mxu0 0
        %807 = vmatprep.subr.bf16.mxu0 0
        %808 = vmatpush1.bf16.xpose.msra.mxu0 0
        %809 = vmatprep.subr.bf16.mxu0 0
        %810 = vmatpush1.bf16.xpose.msra.mxu0 0
        %811 = vmatprep.subr.bf16.mxu0 0
        %812 = vmatpush1.bf16.xpose.msra.mxu0 0
        %813 = vmatprep.subr.bf16.mxu0 0
        %814 = vmatpush1.bf16.xpose.msra.mxu0 0
        %815 = vmatprep.subr.bf16.mxu0 0
        %816 = vmatpush1.bf16.xpose.msra.mxu0 0
        %817 = vmatprep.subr.bf16.mxu0 0
        %818 = vmatpush1.bf16.xpose.msra.mxu0 0
        %819 = vmatprep.mubr.bf16.mxu0 0
        %820 = vmatmul.mubr.bf16.gmra.mrb[0].mxu0 %v756
        %v821 = vpop.f32.mrb[0].mxu0
        %v822 = vadd.f32 %v785, %v821
        %v823 = vpop.f32.mrb[0].mxu0
        %v824 = vpop.f32.mrb[0].mxu0
        %v825 = vadd.f32 %v785, %v824
        %v826 = vpop.f32.mrb[0].mxu0
        %827 = vmatprep.mubr.bf16.mxu0 0
        %828 = vmatmul.mubr.bf16.gmra.mrb[0].mxu0 %v757
        %v829 = vpop.f32.mrb[0].mxu0
        %v830 = vadd.f32 %v785, %v829
        %v831 = vpop.f32.mrb[0].mxu0
        %v832 = vpop.f32.mrb[0].mxu0
        %v833 = vadd.f32 %v785, %v832
        %v834 = vpop.f32.mrb[0].mxu0
        %835 = vmatprep.mubr.bf16.mxu0 0
        %836 = vmatmul.mubr.bf16.gmra.mrb[0].mxu0 %v758
        %v837 = vpop.f32.mrb[0].mxu0
        %v838 = vadd.f32 %v785, %v837
        %v839 = vpop.f32.mrb[0].mxu0
        %v840 = vpop.f32.mrb[0].mxu0
        %v841 = vadd.f32 %v785, %v840
        %v842 = vpop.f32.mrb[0].mxu0
        %843 = vmatprep.mubr.bf16.mxu0 0
        %844 = vmatmul.mubr.bf16.gmra.mrb[0].mxu0 %v759
        %v845 = vpop.f32.mrb[0].mxu0
        %v846 = vadd.f32 %v785, %v845
        %v847 = vpop.f32.mrb[0].mxu0
        %v848 = vpop.f32.mrb[0].mxu0
        %v849 = vadd.f32 %v785, %v848
        %v850 = vpop.f32.mrb[0].mxu0
        %851 = vmatprep.mubr.bf16.mxu0 0
        %852 = vmatmul.mubr.bf16.gmra.mrb[0].mxu0 %v760
        %v853 = vpop.f32.mrb[0].mxu0
        %v854 = vadd.f32 %v785, %v853
        %v855 = vpop.f32.mrb[0].mxu0
        %v856 = vpop.f32.mrb[0].mxu0
        %v857 = vadd.f32 %v785, %v856
        %v858 = vpop.f32.mrb[0].mxu0
        %859 = vmatprep.mubr.bf16.mxu0 0
        %860 = vmatmul.mubr.bf16.gmra.mrb[0].mxu0 %v761
        %v861 = vpop.f32.mrb[0].mxu0
        %v862 = vadd.f32 %v785, %v861
        %v863 = vpop.f32.mrb[0].mxu0
        %v864 = vpop.f32.mrb[0].mxu0
        %v865 = vadd.f32 %v785, %v864
        %v866 = vpop.f32.mrb[0].mxu0
        %867 = vmatprep.mubr.bf16.mxu0 0
        %868 = vmatmul.mubr.bf16.gmra.mrb[0].mxu0 %v762
        %v869 = vpop.f32.mrb[0].mxu0
        %v870 = vadd.f32 %v785, %v869
        %v871 = vpop.f32.mrb[0].mxu0
        %v872 = vpop.f32.mrb[0].mxu0
        %v873 = vadd.f32 %v785, %v872
        %v874 = vpop.f32.mrb[0].mxu0
        %875 = vmatprep.mubr.bf16.mxu0 0
        %876 = vmatmul.mubr.bf16.gmra.mrb[0].mxu0 %v763
        %v877 = vpop.f32.mrb[0].mxu0
        %v878 = vadd.f32 %v785, %v877
        %v879 = vpop.f32.mrb[0].mxu0
        %v880 = vpop.f32.mrb[0].mxu0
        %v881 = vadd.f32 %v785, %v880
        %v882 = vpop.f32.mrb[0].mxu0
        %883 = vdwg.mxu0
        %884 = vmax.xlane.f32.xlu0 %v822
        %v885 = vpop.xlane.xlu0 %884
        %886 = vmax.xlane.f32.xlu0 %v825
        %v887 = vpop.xlane.xlu0 %886
        %888 = vmax.xlane.f32.xlu0 %v830
        %v889 = vpop.xlane.xlu0 %888
        %890 = vmax.xlane.f32.xlu0 %v833
        %v891 = vpop.xlane.xlu0 %890
        %892 = vmax.xlane.f32.xlu0 %v838
        %v893 = vpop.xlane.xlu0 %892
        %894 = vmax.xlane.f32.xlu0 %v841
        %v895 = vpop.xlane.xlu0 %894
        %896 = vmax.xlane.f32.xlu0 %v846
        %v897 = vpop.xlane.xlu0 %896
        %898 = vmax.xlane.f32.xlu0 %v849
        %v899 = vpop.xlane.xlu0 %898
        %900 = vmax.xlane.f32.xlu0 %v854
        %v901 = vpop.xlane.xlu0 %900
        %902 = vmax.xlane.f32.xlu0 %v857
        %v903 = vpop.xlane.xlu0 %902
        %904 = vmax.xlane.f32.xlu0 %v862
        %v905 = vpop.xlane.xlu0 %904
        %906 = vmax.xlane.f32.xlu0 %v865
        %v907 = vpop.xlane.xlu0 %906
        %908 = vmax.xlane.f32.xlu0 %v870
        %v909 = vpop.xlane.xlu0 %908
        %910 = vmax.xlane.f32.xlu0 %v873
        %v911 = vpop.xlane.xlu0 %910
        %912 = vmax.xlane.f32.xlu0 %v878
        %v913 = vpop.xlane.xlu0 %912
        %914 = vmax.xlane.f32.xlu0 %v881
        %v915 = vpop.xlane.xlu0 %914
        %v916 = vsub.f32 %v822, %v885
        %v917 = vsub.f32 %v825, %v887
        %v918 = vsub.f32 %v830, %v889
        %v919 = vsub.f32 %v833, %v891
        %v920 = vsub.f32 %v838, %v893
        %v921 = vsub.f32 %v841, %v895
        %v922 = vsub.f32 %v846, %v897
        %v923 = vsub.f32 %v849, %v899
        %v924 = vsub.f32 %v854, %v901
        %v925 = vsub.f32 %v857, %v903
        %v926 = vsub.f32 %v862, %v905
        %v927 = vsub.f32 %v865, %v907
        %v928 = vsub.f32 %v870, %v909
        %v929 = vsub.f32 %v873, %v911
        %v930 = vsub.f32 %v878, %v913
        %v931 = vsub.f32 %v881, %v915
        %v932 = vmul.f32 %v916, 1.442695
        %v933 = vpow.pop %v932
        %v934 = vmul.f32 %v917, 1.442695
        %v935 = vpow.pop %v934
        %v936 = vmul.f32 %v918, 1.442695
        %v937 = vpow.pop %v936
        %v938 = vmul.f32 %v919, 1.442695
        %v939 = vpow.pop %v938
        %v940 = vmul.f32 %v920, 1.442695
        %v941 = vpow.pop %v940
        %v942 = vmul.f32 %v921, 1.442695
        %v943 = vpow.pop %v942
        %v944 = vmul.f32 %v922, 1.442695
        %v945 = vpow.pop %v944
        %v946 = vmul.f32 %v923, 1.442695
        %v947 = vpow.pop %v946
        %v948 = vmul.f32 %v924, 1.442695
        %v949 = vpow.pop %v948
        %v950 = vmul.f32 %v925, 1.442695
        %v951 = vpow.pop %v950
        %v952 = vmul.f32 %v926, 1.442695
        %v953 = vpow.pop %v952
        %v954 = vmul.f32 %v927, 1.442695
        %v955 = vpow.pop %v954
        %v956 = vmul.f32 %v928, 1.442695
        %v957 = vpow.pop %v956
        %v958 = vmul.f32 %v929, 1.442695
        %v959 = vpow.pop %v958
        %v960 = vmul.f32 %v930, 1.442695
        %v961 = vpow.pop %v960
        %v962 = vmul.f32 %v931, 1.442695
        %v963 = vpow.pop %v962
        %964 = vadd.xlane.f32.xlu0 %v933
        %v965 = vpop.xlane.xlu0 %964
        %966 = vadd.xlane.f32.xlu0 %v935
        %v967 = vpop.xlane.xlu0 %966
        %968 = vadd.xlane.f32.xlu0 %v937
        %v969 = vpop.xlane.xlu0 %968
        %970 = vadd.xlane.f32.xlu0 %v939
        %v971 = vpop.xlane.xlu0 %970
        %972 = vadd.xlane.f32.xlu0 %v941
        %v973 = vpop.xlane.xlu0 %972
        %974 = vadd.xlane.f32.xlu0 %v943
        %v975 = vpop.xlane.xlu0 %974
        %976 = vadd.xlane.f32.xlu0 %v945
        %v977 = vpop.xlane.xlu0 %976
        %978 = vadd.xlane.f32.xlu0 %v947
        %v979 = vpop.xlane.xlu0 %978
        %980 = vadd.xlane.f32.xlu0 %v949
        %v981 = vpop.xlane.xlu0 %980
        %982 = vadd.xlane.f32.xlu0 %v951
        %v983 = vpop.xlane.xlu0 %982
        %984 = vadd.xlane.f32.xlu0 %v953
        %v985 = vpop.xlane.xlu0 %984
        %986 = vadd.xlane.f32.xlu0 %v955
        %v987 = vpop.xlane.xlu0 %986
        %988 = vadd.xlane.f32.xlu0 %v957
        %v989 = vpop.xlane.xlu0 %988
        %990 = vadd.xlane.f32.xlu0 %v959
        %v991 = vpop.xlane.xlu0 %990
        %992 = vadd.xlane.f32.xlu0 %v961
        %v993 = vpop.xlane.xlu0 %992
        %994 = vadd.xlane.f32.xlu0 %v963
        %v995 = vpop.xlane.xlu0 %994
        %v996 = vpack.c.bf16 %v935, %v933
        %v997 = vpack.c.bf16 %v939, %v937
        %v998 = vpack.c.bf16 %v943, %v941
        %v999 = vpack.c.bf16 %v947, %v945
        %v1000 = vpack.c.bf16 %v951, %v949
        %v1001 = vpack.c.bf16 %v955, %v953
        %v1002 = vpack.c.bf16 %v959, %v957
        %v1003 = vpack.c.bf16 %v963, %v961
        %1004 = vmatprep.subr.bf16.mxu0 0
        %1005 = vmatpush1.bf16.msra.mxu0 %v772
        %1006 = vmatprep.subr.bf16.mxu0 0
        %1007 = vmatpush1.bf16.msra.mxu0 %v773
        %1008 = vmatprep.subr.bf16.mxu0 0
        %1009 = vmatpush1.bf16.msra.mxu0 %v774
        %1010 = vmatprep.subr.bf16.mxu0 0
        %1011 = vmatpush1.bf16.msra.mxu0 %v775
        %1012 = vmatprep.subr.bf16.mxu0 0
        %1013 = vmatpush1.bf16.msra.mxu0 %v776
        %1014 = vmatprep.subr.bf16.mxu0 0
        %1015 = vmatpush1.bf16.msra.mxu0 %v777
        %1016 = vmatprep.subr.bf16.mxu0 0
        %1017 = vmatpush1.bf16.msra.mxu0 %v778
        %1018 = vmatprep.subr.bf16.mxu0 0
        %1019 = vmatpush1.bf16.msra.mxu0 %v779
        %1020 = vmatprep.subr.bf16.mxu0 0
        %1021 = vmatpush1.bf16.msra.mxu0 0
        %1022 = vmatprep.subr.bf16.mxu0 0
        %1023 = vmatpush1.bf16.msra.mxu0 0
        %1024 = vmatprep.subr.bf16.mxu0 0
        %1025 = vmatpush1.bf16.msra.mxu0 0
        %1026 = vmatprep.subr.bf16.mxu0 0
        %1027 = vmatpush1.bf16.msra.mxu0 0
        %1028 = vmatprep.subr.bf16.mxu0 0
        %1029 = vmatpush1.bf16.msra.mxu0 0
        %1030 = vmatprep.subr.bf16.mxu0 0
        %1031 = vmatpush1.bf16.msra.mxu0 0
        %1032 = vmatprep.subr.bf16.mxu0 0
        %1033 = vmatpush1.bf16.msra.mxu0 0
        %1034 = vmatprep.subr.bf16.mxu0 0
        %1035 = vmatpush1.bf16.msra.mxu0 0
        %1036 = vmatprep.mubr.bf16.mxu0 0
        %1037 = vmatmul.mubr.bf16.gmra.mrb[0].mxu0 %v996
        %v1038 = vpop.f32.mrb[0].mxu0
        %v1039 = vadd.f32 0.0, %v1038
        %v1040 = vpop.f32.mrb[0].mxu0
        %v1041 = vpop.f32.mrb[0].mxu0
        %v1042 = vadd.f32 0.0, %v1041
        %v1043 = vpop.f32.mrb[0].mxu0
        %1044 = vmatprep.mubr.bf16.mxu0 0
        %1045 = vmatmul.mubr.bf16.gmra.mrb[0].mxu0 %v997
        %v1046 = vpop.f32.mrb[0].mxu0
        %v1047 = vadd.f32 0.0, %v1046
        %v1048 = vpop.f32.mrb[0].mxu0
        %v1049 = vpop.f32.mrb[0].mxu0
        %v1050 = vadd.f32 0.0, %v1049
        %v1051 = vpop.f32.mrb[0].mxu0
        %1052 = vmatprep.mubr.bf16.mxu0 0
        %1053 = vmatmul.mubr.bf16.gmra.mrb[0].mxu0 %v998
        %v1054 = vpop.f32.mrb[0].mxu0
        %v1055 = vadd.f32 0.0, %v1054
        %v1056 = vpop.f32.mrb[0].mxu0
        %v1057 = vpop.f32.mrb[0].mxu0
        %v1058 = vadd.f32 0.0, %v1057
        %v1059 = vpop.f32.mrb[0].mxu0
        %1060 = vmatprep.mubr.bf16.mxu0 0
        %1061 = vmatmul.mubr.bf16.gmra.mrb[0].mxu0 %v999
        %v1062 = vpop.f32.mrb[0].mxu0
        %v1063 = vadd.f32 0.0, %v1062
        %v1064 = vpop.f32.mrb[0].mxu0
        %v1065 = vpop.f32.mrb[0].mxu0
        %v1066 = vadd.f32 0.0, %v1065
        %v1067 = vpop.f32.mrb[0].mxu0
        %1068 = vmatprep.mubr.bf16.mxu0 0
        %1069 = vmatmul.mubr.bf16.gmra.mrb[0].mxu0 %v1000
        %v1070 = vpop.f32.mrb[0].mxu0
        %v1071 = vadd.f32 0.0, %v1070
        %v1072 = vpop.f32.mrb[0].mxu0
        %v1073 = vpop.f32.mrb[0].mxu0
        %v1074 = vadd.f32 0.0, %v1073
        %v1075 = vpop.f32.mrb[0].mxu0
        %1076 = vmatprep.mubr.bf16.mxu0 0
        %1077 = vmatmul.mubr.bf16.gmra.mrb[0].mxu0 %v1001
        %v1078 = vpop.f32.mrb[0].mxu0
        %v1079 = vadd.f32 0.0, %v1078
        %v1080 = vpop.f32.mrb[0].mxu0
        %v1081 = vpop.f32.mrb[0].mxu0
        %v1082 = vadd.f32 0.0, %v1081
        %v1083 = vpop.f32.mrb[0].mxu0
        %1084 = vmatprep.mubr.bf16.mxu0 0
        %1085 = vmatmul.mubr.bf16.gmra.mrb[0].mxu0 %v1002
        %v1086 = vpop.f32.mrb[0].mxu0
        %v1087 = vadd.f32 0.0, %v1086
        %v1088 = vpop.f32.mrb[0].mxu0
        %v1089 = vpop.f32.mrb[0].mxu0
        %v1090 = vadd.f32 0.0, %v1089
        %v1091 = vpop.f32.mrb[0].mxu0
        %1092 = vmatprep.mubr.bf16.mxu0 0
        %1093 = vmatmul.mubr.bf16.gmra.mrb[0].mxu0 %v1003
        %v1094 = vpop.f32.mrb[0].mxu0
        %v1095 = vadd.f32 0.0, %v1094
        %v1096 = vpop.f32.mrb[0].mxu0
        %v1097 = vpop.f32.mrb[0].mxu0
        %v1098 = vadd.f32 0.0, %v1097
        %v1099 = vpop.f32.mrb[0].mxu0
        %1100 = vdwg.mxu0
        %v1101 = vrcp.pop %v965
        %v1102 = vrcp.pop %v967
        %v1103 = vrcp.pop %v969
        %v1104 = vrcp.pop %v971
        %v1105 = vrcp.pop %v973
        %v1106 = vrcp.pop %v975
        %v1107 = vrcp.pop %v977
        %v1108 = vrcp.pop %v979
        %v1109 = vrcp.pop %v981
        %v1110 = vrcp.pop %v983
        %v1111 = vrcp.pop %v985
        %v1112 = vrcp.pop %v987
        %v1113 = vrcp.pop %v989
        %v1114 = vrcp.pop %v991
        %v1115 = vrcp.pop %v993
        %v1116 = vrcp.pop %v995
        %v1117 = vmul.f32 %v1039, %v1101
        %v1118 = vmul.f32 %v1042, %v1102
        %v1119 = vmul.f32 %v1047, %v1103
        %v1120 = vmul.f32 %v1050, %v1104
        %v1121 = vmul.f32 %v1055, %v1105
        %v1122 = vmul.f32 %v1058, %v1106
        %v1123 = vmul.f32 %v1063, %v1107
        %v1124 = vmul.f32 %v1066, %v1108
        %v1125 = vmul.f32 %v1071, %v1109
        %v1126 = vmul.f32 %v1074, %v1110
        %v1127 = vmul.f32 %v1079, %v1111
        %v1128 = vmul.f32 %v1082, %v1112
        %v1129 = vmul.f32 %v1087, %v1113
        %v1130 = vmul.f32 %v1090, %v1114
        %v1131 = vmul.f32 %v1095, %v1115
        %v1132 = vmul.f32 %v1098, %v1116
        %1133 = vst [vmem:[%s244] sm:$0xff] %v1117
        %1134 = vst [vmem:[%s244 + $0x8] sm:$0xff] %v1118
        %1135 = vst [vmem:[%s244 + $0x10] sm:$0xff] %v1119
        %1136 = vst [vmem:[%s244 + $0x18] sm:$0xff] %v1120
        %1137 = vst [vmem:[%s244 + $0x20] sm:$0xff] %v1121
        %1138 = vst [vmem:[%s244 + $0x28] sm:$0xff] %v1122
        %1139 = vst [vmem:[%s244 + $0x30] sm:$0xff] %v1123
        %1140 = vst [vmem:[%s244 + $0x38] sm:$0xff] %v1124
        %1141 = vst [vmem:[%s244 + $0x40] sm:$0xff] %v1125
        %1142 = vst [vmem:[%s244 + $0x48] sm:$0xff] %v1126
        %1143 = vst [vmem:[%s244 + $0x50] sm:$0xff] %v1127
        %1144 = vst [vmem:[%s244 + $0x58] sm:$0xff] %v1128
        %1145 = vst [vmem:[%s244 + $0x60] sm:$0xff] %v1129
        %1146 = vst [vmem:[%s244 + $0x68] sm:$0xff] %v1130
        %1147 = vst [vmem:[%s244 + $0x70] sm:$0xff] %v1131
        %1148 = vst [vmem:[%s244 + $0x78] sm:$0xff] %v1132
        %s1149 = sand.u32 %s133, 1
        %s1150 = scalar_lea.sflag [#allocation5], %s1149
        %s1151 = sand.u32 %s133, 1
        %s1152 = smul.addr %s1151, 128
        %s1153 = scalar_lea.vmem [#allocation8], %s1152
        // Predicated region
        $region49: #{tpu_custom_call.1} parent=35 // pred_check
          %p1154 = pneg %p143
        $region50: #{tpu_custom_call.1} parent=35 // pred_check_branch
          %1156 = sbr.rel (%p1154) target = $region52
        $region51: #{tpu_custom_call.1} parent=35 // pred_region
          %s1157 = smul.u32 16, %s27
          %s1159 = ssub.s32 2048, 2048
          %1160 = vsyncadd %s1150, %s1159
          %s1161 = smul.addr %s26, 16
          %s1162 = sadd.s32 %s1157, %s1161
          %s1163 = smul.addr %s1162, 128
          %s1164 = scalar_lea.hbm %s4, %s1163
          %s1165 = sshll.u32 %s1153, 4
          %s1166 = int_to_ptr.vmem [resolvable:$true] %s1165
          %1171 = dma.vmem_to_hbm [thread:$0]  %s1166, 2048, %s1164, %s1150, 128, 128, 8
        $region52: #{tpu_custom_call.1} parent=35 // pred_fallthru
          _
      $region36: #{tpu_custom_call.1} parent=5 // pred_fallthru
        _
      %p1172 = scmp.le.s32.totalorder 2, %s17
      // Predicated region
      $region53: #{tpu_custom_call.1} parent=5 // pred_check
        %p1173 = pneg %p1172
      $region54: #{tpu_custom_call.1} parent=5 // pred_check_branch
        %1175 = sbr.rel (%p1173) target = $region56
      $region55: #{tpu_custom_call.1} parent=5 // pred_region
        %s1176 = ssub.s32 %s17, 2
        // Predicated region
        $region57: #{tpu_custom_call.1} parent=55 // pred_check
          %p1177 = pneg %p149
        $region58: #{tpu_custom_call.1} parent=55 // pred_check_branch
          %1179 = sbr.rel (%p1177) target = $region60
        $region59: #{tpu_custom_call.1} parent=55 // pred_region
          %s1180 = sand.u32 %s134, 1
          %s1181 = scalar_lea.sflag [#allocation5], %s1180
          %s1182 = sand.u32 %s134, 1
          %s1183 = smul.addr %s1182, 128
          %s1184 = scalar_lea.vmem [#allocation8], %s1183
          %1185 = dma.done %s1181, 2048
        $region60: #{tpu_custom_call.1} parent=55 // pred_fallthru
          _
      $region56: #{tpu_custom_call.1} parent=5 // pred_fallthru
        _
    $region6: #{tpu_custom_call.1} parent=1 // loop_footer
      %s21 = sadd.s32 1, %s17
    $region7: #{tpu_custom_call.1} parent=1 // loop_footer_branch
      %16 = sbr.rel target = $region3
    $region8: #{tpu_custom_call.1} parent=1 // loop_exit
      _
    %1186 = vsyncpa [#allocation4], 1
    %s1187 = scalar_lea.sflag [#allocation4], 1
    %1188 = vsyncpa %s1187, 1
    %1189 = vsyncpa [#allocation7], 1
    %1190 = vsyncpa [#allocation5], 1
    %s1191 = scalar_lea.sflag [#allocation5], 1
    %1192 = vsyncpa %s1191, 1

// kernel: tpu_custom_call.1
$region0: #{tpu_custom_call.1}
  #allocation0 [shape = 'u32[]', space=smem, size = 0x4, offset = 0x4, fixed_abs, tag = 'smem constant byte address 0x4 - core index']
  #allocation1 [shape = 'u32[144,128]{1,0:T(1,128)}', space=vmem, size = 0x12000, scoped, tag = 'internal scratch']
  #allocation2 [shape = 'bf16[1,128,384]{2,1,0:T(16,128)(2,1)}', space=vmem, size = 0x18000, scoped, tag = 'scratch operand']
  %s0 = inlined_call_operand.hbm [shape: bf16[2,128,128], index: 0, kind: input, shape index: {}]
  %s1 = inlined_call_operand.hbm [shape: bf16[128,384], index: 1, kind: input, shape index: {}]
  %s2 = inlined_call_operand.vmem [shape: f32[1,384], index: 2, kind: input, shape index: {}]
  %s3 = inlined_call_operand.vmem [shape: f32[1,128], index: 3, kind: input, shape index: {}]
  %s4 = inlined_call_operand.hbm [shape: f32[2,128,128], index: 4, kind: output, shape index: {}]
  %s5 = sld [smem:[#allocation0]]
  $region61: #{tpu_custom_call.1} parent=0
    _
  %s7 = ssub.s32 1, %s5
  %s8 = scalar_select 0, %s7, %s5
  $region1: #{tpu_custom_call.1} parent=0
    #allocation3 [shape = 'u8[65536]{0}', space=vmem, size = 0x10000, scoped, tag = 'input window, operand 0']
    #allocation4 [shape = 's32[2]{0}', space=sflag, size = 0x8, scoped, tag = 'scoped memory for tpu_custom_call.1']
    #allocation5 [shape = 's32[2]{0}', space=sflag, size = 0x8, scoped, tag = 'scoped memory for tpu_custom_call.1']
    #allocation6 [shape = 'u8[98304]{0}', space=vmem, size = 0x18000, scoped, tag = 'input window, operand 1, single buffered']
    #allocation7 [shape = 's32[1]{0}', space=sflag, size = 0x4, scoped, tag = 'scoped memory for tpu_custom_call.1']
    #allocation8 [shape = 'u8[131072]{0}', space=vmem, size = 0x20000, scoped, tag = 'output window, operand 0']
    %9 = vsyncpa [#allocation4], 0
    %s10 = scalar_lea.sflag [#allocation4], 1
    %11 = vsyncpa %s10, 0
    %12 = vsyncpa [#allocation7], 0
    %13 = vsyncpa [#allocation5], 0
    %s14 = scalar_lea.sflag [#allocation5], 1
    %15 = vsyncpa %s14, 0
    loop: start=0, step=1, limit=4
    $region2: #{tpu_custom_call.1} parent=1 // loop_pre_header
      _
    $region3: #{tpu_custom_call.1} parent=1 // loop_header
      %s17 = sphi 0, %s21
      %p18 = scmp.ge.s32.totalorder %s17, 4
      %s24 = sphi 0, %s36
      %s25 = sphi 0, %s32
      %s26 = sphi 0, %s24
      %s27 = sphi 0, %s25
      %s28 = sphi 0, %s26
      %s29 = sphi 0, %s27
      %s39 = sphi 0, %s41
      %s42 = sphi 0, %s39
      %s43 = sphi 0, %s42
      %s59 = sphi 0, %s43
      %s63 = sphi 0, %s63
      %s65 = sphi 0, %s63
      %s66 = sphi 0, %s65
      %s80 = sphi 0, %s66
      %s84 = sphi 0, %s84
      %s86 = sphi 0, %s84
      %s87 = sphi 0, %s86
      %s101 = sphi 0, %s87
      %s105 = sphi 0, %s105
      %s107 = sphi 0, %s105
      %s108 = sphi 0, %s107
      %s122 = sphi 0, %s108
      %s130 = sphi 0, %s132
      %s133 = sphi 0, %s130
      %s134 = sphi 0, %s133
      %s150 = sphi 0, %s134
    $region4: #{tpu_custom_call.1} parent=1 // loop_header_branch
      %20 = sbr.rel (%p18) target = $region8
    $region5: #{tpu_custom_call.1} parent=1 // loop_body
      %s22 = ssub.s32 %s17, 1
      %s23 = ssub.s32 %s17, 2
      %s30 = sadd.s32 1, %s25
      %p31 = scmp.ge.s32.totalorder %s30, 1
      %s32 = scalar_select %p31, 0, %s30
      %s33 = sadd.s32 1, %s24
      %s34 = scalar_select %p31, %s33, %s24
      %p35 = scmp.ge.s32.totalorder %s34, 2
      %s36 = scalar_select %p35, 0, %s34
      %s37 = ssub.s32 %s24, %s36
      %p38 = scmp.eq.s32.totalorder %s37, 0
      %s40 = sadd.s32 %s39, 1
      %s41 = scalar_select %p38, %s39, %s40
      %p44 = pneg %p38
      %p45 = scmp.eq.s32.totalorder %s17, 1
      %p46 = por %p44, %p45
      %p47 = scmp.ne.s32.totalorder %s39, %s42
      %p48 = scmp.eq.s32.totalorder %s17, 0
      %p49 = por %p47, %p48
      %p50 = scmp.ne.s32.totalorder %s39, %s42
      %p51 = scmp.eq.s32.totalorder %s22, 1
      %p52 = por %p50, %p51
      %p53 = scmp.ne.s32.totalorder %s42, %s43
      %p54 = scmp.eq.s32.totalorder %s22, 0
      %p55 = por %p53, %p54
      %p56 = scmp.ne.s32.totalorder %s42, %s43
      %p57 = scmp.eq.s32.totalorder %s23, 1
      %p58 = por %p56, %p57
      %p60 = scmp.ne.s32.totalorder %s43, %s59
      %p61 = scmp.eq.s32.totalorder %s23, 0
      %p62 = por %p60, %p61
      %s64 = sadd.s32 %s63, 1
      %p67 = scmp.eq.s32.totalorder %s17, 1
      %p68 = scmp.ne.s32.totalorder %s63, %s65
      %p69 = scmp.eq.s32.totalorder %s17, 0
      %p70 = por %p68, %p69
      %p71 = scmp.ne.s32.totalorder %s63, %s65
      %p72 = scmp.eq.s32.totalorder %s22, 1
      %p73 = por %p71, %p72
      %p74 = scmp.ne.s32.totalorder %s65, %s66
      %p75 = scmp.eq.s32.totalorder %s22, 0
      %p76 = por %p74, %p75
      %p77 = scmp.ne.s32.totalorder %s65, %s66
      %p78 = scmp.eq.s32.totalorder %s23, 1
      %p79 = por %p77, %p78
      %p81 = scmp.ne.s32.totalorder %s66, %s80
      %p82 = scmp.eq.s32.totalorder %s23, 0
      %p83 = por %p81, %p82
      %s85 = sadd.s32 %s84, 1
      %p88 = scmp.eq.s32.totalorder %s17, 1
      %p89 = scmp.ne.s32.totalorder %s84, %s86
      %p90 = scmp.eq.s32.totalorder %s17, 0
      %p91 = por %p89, %p90
      %p92 = scmp.ne.s32.totalorder %s84, %s86
      %p93 = scmp.eq.s32.totalorder %s22, 1
      %p94 = por %p92, %p93
      %p95 = scmp.ne.s32.totalorder %s86, %s87
      %p96 = scmp.eq.s32.totalorder %s22, 0
      %p97 = por %p95, %p96
      %p98 = scmp.ne.s32.totalorder %s86, %s87
      %p99 = scmp.eq.s32.totalorder %s23, 1
      %p100 = por %p98, %p99
      %p102 = scmp.ne.s32.totalorder %s87, %s101
      %p103 = scmp.eq.s32.totalorder %s23, 0
      %p104 = por %p102, %p103
      %s106 = sadd.s32 %s105, 1
      %p109 = scmp.eq.s32.totalorder %s17, 1
      %p110 = scmp.ne.s32.totalorder %s105, %s107
      %p111 = scmp.eq.s32.totalorder %s17, 0
      %p112 = por %p110, %p111
      %p113 = scmp.ne.s32.totalorder %s105, %s107
      %p114 = scmp.eq.s32.totalorder %s22, 1
      %p115 = por %p113, %p114
      %p116 = scmp.ne.s32.totalorder %s107, %s108
      %p117 = scmp.eq.s32.totalorder %s22, 0
      %p118 = por %p116, %p117
      %p119 = scmp.ne.s32.totalorder %s107, %s108
      %p120 = scmp.eq.s32.totalorder %s23, 1
      %p121 = por %p119, %p120
      %p123 = scmp.ne.s32.totalorder %s108, %s122
      %p124 = scmp.eq.s32.totalorder %s23, 0
      %p125 = por %p123, %p124
      %s126 = ssub.s32 %s24, %s36
      %s127 = ssub.s32 %s25, %s32
      %s128 = sor.u32 %s126, %s127
      %p129 = scmp.eq.s32.totalorder %s128, 0
      %s131 = sadd.s32 %s130, 1
      %s132 = scalar_select %p129, %s130, %s131
      %p135 = pneg %p129
      %p136 = scmp.eq.s32.totalorder %s17, 1
      %p137 = por %p135, %p136
      %p138 = scmp.ne.s32.totalorder %s130, %s133
      %p139 = scmp.eq.s32.totalorder %s17, 0
      %p140 = por %p138, %p139
      %p141 = scmp.ne.s32.totalorder %s130, %s133
      %p142 = scmp.eq.s32.totalorder %s22, 1
      %p143 = por %p141, %p142
      %p144 = scmp.ne.s32.totalorder %s133, %s134
      %p145 = scmp.eq.s32.totalorder %s22, 0
      %p146 = por %p144, %p145
      %p147 = scmp.ne.s32.totalorder %s133, %s134
      %p148 = scmp.eq.s32.totalorder %s23, 1
      %p149 = por %p147, %p148
      %p151 = scmp.ne.s32.totalorder %s134, %s150
      %p152 = scmp.eq.s32.totalorder %s23, 0
      %p153 = por %p151, %p152
      %p154 = scmp.le.s32.totalorder 1, %s17
      %p155 = scmp.lt.s32.totalorder %s17, 3
      %p156 = pnand %p154, %p155
      %p157 = pneg %p156
      // Predicated region
      $region9: #{tpu_custom_call.1} parent=5 // pred_check
        _
      $region10: #{tpu_custom_call.1} parent=5 // pred_check_branch
        %159 = sbr.rel (%p156) target = $region12
      $region11: #{tpu_custom_call.1} parent=5 // pred_region
        %s160 = ssub.s32 %s17, 1
        // Predicated region
        $region13: #{tpu_custom_call.1} parent=11 // pred_check
          %p161 = pneg %p76
        $region14: #{tpu_custom_call.1} parent=11 // pred_check_branch
          %163 = sbr.rel (%p161) target = $region16
        $region15: #{tpu_custom_call.1} parent=11 // pred_region
          %s165 = ssub.s32 3072, 3072
          %166 = vsyncadd [#allocation7], %s165
          %s167 = sshll.u32 [#allocation6], 4
          %s168 = int_to_ptr.vmem [resolvable:$true] %s167
          %173 = dma.hbm_to_vmem [thread:$0]  %s1, 3072, %s168, [#allocation7], 192, 192, 12
        $region16: #{tpu_custom_call.1} parent=11 // pred_fallthru
          _
        // Predicated region
        $region17: #{tpu_custom_call.1} parent=11 // pred_check
          %p174 = pneg %p97
        $region18: #{tpu_custom_call.1} parent=11 // pred_check_branch
          %176 = sbr.rel (%p174) target = $region20
        $region19: #{tpu_custom_call.1} parent=11 // pred_region
          _
        $region20: #{tpu_custom_call.1} parent=11 // pred_fallthru
          _
        // Predicated region
        $region21: #{tpu_custom_call.1} parent=11 // pred_check
          %p177 = pneg %p118
        $region22: #{tpu_custom_call.1} parent=11 // pred_check_branch
          %179 = sbr.rel (%p177) target = $region24
        $region23: #{tpu_custom_call.1} parent=11 // pred_region
          _
        $region24: #{tpu_custom_call.1} parent=11 // pred_fallthru
          _
      $region12: #{tpu_custom_call.1} parent=5 // pred_fallthru
        _
      %p180 = scmp.lt.s32.totalorder %s17, 2
      // Predicated region
      $region25: #{tpu_custom_call.1} parent=5 // pred_check
        %p181 = pneg %p180
      $region26: #{tpu_custom_call.1} parent=5 // pred_check_branch
        %183 = sbr.rel (%p181) target = $region28
      $region27: #{tpu_custom_call.1} parent=5 // pred_region
        // Predicated region
        $region29: #{tpu_custom_call.1} parent=27 // pred_check
          %p184 = pneg %p49
        $region30: #{tpu_custom_call.1} parent=27 // pred_check_branch
          %186 = sbr.rel (%p184) target = $region32
        $region31: #{tpu_custom_call.1} parent=27 // pred_region
          %s187 = sand.u32 %s39, 1
          %s188 = scalar_lea.sflag [#allocation4], %s187
          %s189 = sand.u32 %s39, 1
          %s190 = smul.addr %s189, 64
          %s191 = scalar_lea.vmem [#allocation3], %s190
          %s193 = ssub.s32 1024, 1024
          %194 = vsyncadd %s188, %s193
          %s195 = smul.addr %s24, 16
          %s196 = smul.addr %s195, 64
          %s197 = scalar_lea.hbm %s0, %s196
          %s198 = sshll.u32 %s191, 4
          %s199 = int_to_ptr.vmem [resolvable:$true] %s198
          %204 = dma.hbm_to_vmem [thread:$0]  %s197, 1024, %s199, %s188, 64, 64, 4
        $region32: #{tpu_custom_call.1} parent=27 // pred_fallthru
          _
      $region28: #{tpu_custom_call.1} parent=5 // pred_fallthru
        _
      %p205 = scmp.le.s32.totalorder 1, %s17
      %p206 = scmp.lt.s32.totalorder %s17, 3
      %p207 = pnand %p205, %p206
      %p208 = pneg %p207
      // Predicated region
      $region33: #{tpu_custom_call.1} parent=5 // pred_check
        _
      $region34: #{tpu_custom_call.1} parent=5 // pred_check_branch
        %210 = sbr.rel (%p207) target = $region36
      $region35: #{tpu_custom_call.1} parent=5 // pred_region
        %s211 = ssub.s32 %s17, 1
        %s212 = sand.u32 %s42, 1
        %s213 = scalar_lea.sflag [#allocation4], %s212
        %s214 = sand.u32 %s42, 1
        %s215 = smul.addr %s214, 64
        %s216 = scalar_lea.vmem [#allocation3], %s215
        // Predicated region
        $region37: #{tpu_custom_call.1} parent=35 // pred_check
          %p217 = pneg %p55
        $region38: #{tpu_custom_call.1} parent=35 // pred_check_branch
          %219 = sbr.rel (%p217) target = $region40
        $region39: #{tpu_custom_call.1} parent=35 // pred_region
          %220 = dma.done %s213, 1024
        $region40: #{tpu_custom_call.1} parent=35 // pred_fallthru
          _
        // Predicated region
        $region41: #{tpu_custom_call.1} parent=35 // pred_check
          %p221 = pneg %p76
        $region42: #{tpu_custom_call.1} parent=35 // pred_check_branch
          %223 = sbr.rel (%p221) target = $region44
        $region43: #{tpu_custom_call.1} parent=35 // pred_region
          %224 = dma.done [#allocation7], 3072
        $region44: #{tpu_custom_call.1} parent=35 // pred_fallthru
          _
        %s225 = sand.u32 %s42, 1
        %s226 = scalar_lea.sflag [#allocation4], %s225
        %s227 = sand.u32 %s42, 1
        %s228 = smul.addr %s227, 64
        %s229 = scalar_lea.vmem [#allocation3], %s228
        %p230 = pneg %p55
        %p231 = pneg %p52
        %p232 = pneg %p76
        %p233 = pneg %p73
        %p234 = pneg %p97
        %p235 = pneg %p94
        %p236 = pneg %p118
        %p237 = pneg %p115
        %p238 = pneg %p146
        %p239 = pneg %p143
        %s240 = sand.u32 %s133, 1
        %s241 = scalar_lea.sflag [#allocation5], %s240
        %s242 = sand.u32 %s133, 1
        %s243 = smul.addr %s242, 128
        %s244 = scalar_lea.vmem [#allocation8], %s243
        %s245 = smul.u32 16, %s27
        %p247 = scmp.eq.s32.totalorder %s27, 0
        // Predicated region
        $region45: #{tpu_custom_call.1} parent=35 // pred_check
          %p248 = pneg %p247
        $region46: #{tpu_custom_call.1} parent=35 // pred_check_branch
          %250 = sbr.rel (%p248) target = $region48
        $region47: #{tpu_custom_call.1} parent=35 // pred_region
          %v251 = vld [vmem:[%s216] sm:$0xf]
          %v252 = vld [vmem:[%s216 + $0x4] sm:$0xf]
          %v253 = vld [vmem:[%s216 + $0x8] sm:$0xf]
          %v254 = vld [vmem:[%s216 + $0xc] sm:$0xf]
          %v255 = vld [vmem:[%s216 + $0x10] sm:$0xf]
          %v256 = vld [vmem:[%s216 + $0x14] sm:$0xf]
          %v257 = vld [vmem:[%s216 + $0x18] sm:$0xf]
          %v258 = vld [vmem:[%s216 + $0x1c] sm:$0xf]
          %v259 = vld [vmem:[%s216 + $0x20] sm:$0xf]
          %v260 = vld [vmem:[%s216 + $0x24] sm:$0xf]
          %v261 = vld [vmem:[%s216 + $0x28] sm:$0xf]
          %v262 = vld [vmem:[%s216 + $0x2c] sm:$0xf]
          %v263 = vld [vmem:[%s216 + $0x30] sm:$0xf]
          %v264 = vld [vmem:[%s216 + $0x34] sm:$0xf]
          %v265 = vld [vmem:[%s216 + $0x38] sm:$0xf]
          %v266 = vld [vmem:[%s216 + $0x3c] sm:$0xf]
          %v267 = vld [vmem:[#allocation6] sm:$0xff]
          %v268 = vld [vmem:[#allocation6 + $0x8] sm:$0xf]
          %v269 = vld [vmem:[#allocation6 + $0xc] sm:$0xff]
          %v270 = vld [vmem:[#allocation6 + $0x14] sm:$0xf]
          %v271 = vld [vmem:[#allocation6 + $0x18] sm:$0xff]
          %v272 = vld [vmem:[#allocation6 + $0x20] sm:$0xf]
          %v273 = vld [vmem:[#allocation6 + $0x24] sm:$0xff]
          %v274 = vld [vmem:[#allocation6 + $0x2c] sm:$0xf]
          %v275 = vld [vmem:[#allocation6 + $0x30] sm:$0xff]
          %v276 = vld [vmem:[#allocation6 + $0x38] sm:$0xf]
          %v277 = vld [vmem:[#allocation6 + $0x3c] sm:$0xff]
          %v278 = vld [vmem:[#allocation6 + $0x44] sm:$0xf]
          %v279 = vld [vmem:[#allocation6 + $0x48] sm:$0xff]
          %v280 = vld [vmem:[#allocation6 + $0x50] sm:$0xf]
          %v281 = vld [vmem:[#allocation6 + $0x54] sm:$0xff]
          %v282 = vld [vmem:[#allocation6 + $0x5c] sm:$0xf]
          %v283 = vld [vmem:[#allocation6 + $0x60] sm:$0xff]
          %v284 = vld [vmem:[#allocation6 + $0x68] sm:$0xf]
          %v285 = vld [vmem:[#allocation6 + $0x6c] sm:$0xff]
          %v286 = vld [vmem:[#allocation6 + $0x74] sm:$0xf]
          %v287 = vld [vmem:[#allocation6 + $0x78] sm:$0xff]
          %v288 = vld [vmem:[#allocation6 + $0x80] sm:$0xf]
          %v289 = vld [vmem:[#allocation6 + $0x84] sm:$0xff]
          %v290 = vld [vmem:[#allocation6 + $0x8c] sm:$0xf]
          %v291 = vld [vmem:[#allocation6 + $0x90] sm:$0xff]
          %v292 = vld [vmem:[#allocation6 + $0x98] sm:$0xf]
          %v293 = vld [vmem:[#allocation6 + $0x9c] sm:$0xff]
          %v294 = vld [vmem:[#allocation6 + $0xa4] sm:$0xf]
          %v295 = vld [vmem:[#allocation6 + $0xa8] sm:$0xff]
          %v296 = vld [vmem:[#allocation6 + $0xb0] sm:$0xf]
          %v297 = vld [vmem:[#allocation6 + $0xb4] sm:$0xff]
          %v298 = vld [vmem:[#allocation6 + $0xbc] sm:$0xf]
          %v299 = vld [vmem:[%s2] sm:$0x7]
          %v301 = vlaneseq
          %v302 = vshrl.u32 %v301, 7
          %v303 = vsub.s32 0, %v302
          %v304 = vrot.slane %v299, %v303
          %v305 = vlaneseq
          %v306 = vshrl.u32 %v305, 7
          %v307 = vsub.s32 1, %v306
          %v308 = vrot.slane %v299, %v307
          %v309 = vlaneseq
          %v310 = vshrl.u32 %v309, 7
          %v311 = vsub.s32 2, %v310
          %v312 = vrot.slane %v299, %v311
          %v332 = vunpack.c.l.b16 %v251
          %v333 = vunpack.c.l.b16 %v252
          %v334 = vunpack.c.l.b16 %v253
          %v335 = vunpack.c.l.b16 %v254
          %v336 = vunpack.c.l.b16 %v255
          %v337 = vunpack.c.l.b16 %v256
          %v338 = vunpack.c.l.b16 %v257
          %v339 = vunpack.c.l.b16 %v258
          %v340 = vunpack.c.l.b16 %v259
          %v341 = vunpack.c.l.b16 %v260
          %v342 = vunpack.c.l.b16 %v261
          %v343 = vunpack.c.l.b16 %v262
          %v344 = vunpack.c.l.b16 %v263
          %v345 = vunpack.c.l.b16 %v264
          %v346 = vunpack.c.l.b16 %v265
          %v347 = vunpack.c.l.b16 %v266
          %v348 = vpack.c.b16 %v333, %v332
          %v349 = vpack.c.b16 %v335, %v334
          %v350 = vpack.c.b16 %v337, %v336
          %v351 = vpack.c.b16 %v339, %v338
          %v352 = vpack.c.b16 %v341, %v340
          %v353 = vpack.c.b16 %v343, %v342
          %v354 = vpack.c.b16 %v345, %v344
          %v355 = vpack.c.b16 %v347, %v346
          %v396 = vunpack.c.l.b16 %v267
          %v397 = vunpack.c.h.b16 %v267
          %v398 = vunpack.c.l.b16 %v268
          %v399 = vunpack.c.l.b16 %v269
          %v400 = vunpack.c.h.b16 %v269
          %v401 = vunpack.c.l.b16 %v270
          %v402 = vunpack.c.l.b16 %v271
          %v403 = vunpack.c.h.b16 %v271
          %v404 = vunpack.c.l.b16 %v272
          %v405 = vunpack.c.l.b16 %v273
          %v406 = vunpack.c.h.b16 %v273
          %v407 = vunpack.c.l.b16 %v274
          %v408 = vunpack.c.l.b16 %v275
          %v409 = vunpack.c.h.b16 %v275
          %v410 = vunpack.c.l.b16 %v276
          %v411 = vunpack.c.l.b16 %v277
          %v412 = vunpack.c.h.b16 %v277
          %v413 = vunpack.c.l.b16 %v278
          %v414 = vunpack.c.l.b16 %v279
          %v415 = vunpack.c.h.b16 %v279
          %v416 = vunpack.c.l.b16 %v280
          %v417 = vunpack.c.l.b16 %v281
          %v418 = vunpack.c.h.b16 %v281
          %v419 = vunpack.c.l.b16 %v282
          %v420 = vunpack.c.l.b16 %v283
          %v421 = vunpack.c.h.b16 %v283
          %v422 = vunpack.c.l.b16 %v284
          %v423 = vunpack.c.l.b16 %v285
          %v424 = vunpack.c.h.b16 %v285
          %v425 = vunpack.c.l.b16 %v286
          %v426 = vunpack.c.l.b16 %v287
          %v427 = vunpack.c.h.b16 %v287
          %v428 = vunpack.c.l.b16 %v288
          %v429 = vunpack.c.l.b16 %v289
          %v430 = vunpack.c.h.b16 %v289
          %v431 = vunpack.c.l.b16 %v290
          %v432 = vunpack.c.l.b16 %v291
          %v433 = vunpack.c.h.b16 %v291
          %v434 = vunpack.c.l.b16 %v292
          %v435 = vunpack.c.l.b16 %v293
          %v436 = vunpack.c.h.b16 %v293
          %v437 = vunpack.c.l.b16 %v294
          %v438 = vunpack.c.l.b16 %v295
          %v439 = vunpack.c.h.b16 %v295
          %v440 = vunpack.c.l.b16 %v296
          %v441 = vunpack.c.l.b16 %v297
          %v442 = vunpack.c.h.b16 %v297
          %v443 = vunpack.c.l.b16 %v298
          %v444 = vpack.c.b16 %v399, %v396
          %v445 = vpack.c.b16 %v400, %v397
          %v446 = vpack.c.b16 %v401, %v398
          %v447 = vpack.c.b16 %v405, %v402
          %v448 = vpack.c.b16 %v406, %v403
          %v449 = vpack.c.b16 %v407, %v404
          %v450 = vpack.c.b16 %v411, %v408
          %v451 = vpack.c.b16 %v412, %v409
          %v452 = vpack.c.b16 %v413, %v410
          %v453 = vpack.c.b16 %v417, %v414
          %v454 = vpack.c.b16 %v418, %v415
          %v455 = vpack.c.b16 %v419, %v416
          %v456 = vpack.c.b16 %v423, %v420
          %v457 = vpack.c.b16 %v424, %v421
          %v458 = vpack.c.b16 %v425, %v422
          %v459 = vpack.c.b16 %v429, %v426
          %v460 = vpack.c.b16 %v430, %v427
          %v461 = vpack.c.b16 %v431, %v428
          %v462 = vpack.c.b16 %v435, %v432
          %v463 = vpack.c.b16 %v436, %v433
          %v464 = vpack.c.b16 %v437, %v434
          %v465 = vpack.c.b16 %v441, %v438
          %v466 = vpack.c.b16 %v442, %v439
          %v467 = vpack.c.b16 %v443, %v440
          %492 = vmatprep.subr.bf16.mxu0 %v445
          %493 = vmatpush1.bf16.msra.mxu0 %v444
          %494 = vmatprep.subr.bf16.mxu0 %v448
          %495 = vmatpush1.bf16.msra.mxu0 %v447
          %496 = vmatprep.subr.bf16.mxu0 %v451
          %497 = vmatpush1.bf16.msra.mxu0 %v450
          %498 = vmatprep.subr.bf16.mxu0 %v454
          %499 = vmatpush1.bf16.msra.mxu0 %v453
          %500 = vmatprep.subr.bf16.mxu0 %v457
          %501 = vmatpush1.bf16.msra.mxu0 %v456
          %502 = vmatprep.subr.bf16.mxu0 %v460
          %503 = vmatpush1.bf16.msra.mxu0 %v459
          %504 = vmatprep.subr.bf16.mxu0 %v463
          %505 = vmatpush1.bf16.msra.mxu0 %v462
          %506 = vmatprep.subr.bf16.mxu0 %v466
          %507 = vmatpush1.bf16.msra.mxu0 %v465
          %508 = vmatprep.subr.bf16.mxu0 0
          %509 = vmatpush1.bf16.msra.mxu0 0
          %510 = vmatprep.subr.bf16.mxu0 0
          %511 = vmatpush1.bf16.msra.mxu0 0
          %512 = vmatprep.subr.bf16.mxu0 0
          %513 = vmatpush1.bf16.msra.mxu0 0
          %514 = vmatprep.subr.bf16.mxu0 0
          %515 = vmatpush1.bf16.msra.mxu0 0
          %516 = vmatprep.subr.bf16.mxu0 0
          %517 = vmatpush1.bf16.msra.mxu0 0
          %518 = vmatprep.subr.bf16.mxu0 0
          %519 = vmatpush1.bf16.msra.mxu0 0
          %520 = vmatprep.subr.bf16.mxu0 0
          %521 = vmatpush1.bf16.msra.mxu0 0
          %522 = vmatprep.subr.bf16.mxu0 0
          %523 = vmatpush1.bf16.msra.mxu0 0
          %524 = vmatprep.mubr.bf16.mxu0 0
          %525 = vmatmul.mubr.bf16.gmra.mrb[0].mxu0 %v348
          %v526 = vpop.f32.mrb[0].mxu0
          %v527 = vadd.f32 %v304, %v526
          %v528 = vpop.f32.mrb[0].mxu0
          %v529 = vadd.f32 %v308, %v528
          %v530 = vpop.f32.mrb[0].mxu0
          %v531 = vadd.f32 %v304, %v530
          %v532 = vpop.f32.mrb[0].mxu0
          %v533 = vadd.f32 %v308, %v532
          %534 = vmatprep.mubr.bf16.mxu0 0
          %535 = vmatmul.mubr.bf16.gmra.mrb[0].mxu0 %v349
          %v536 = vpop.f32.mrb[0].mxu0
          %v537 = vadd.f32 %v304, %v536
          %v538 = vpop.f32.mrb[0].mxu0
          %v539 = vadd.f32 %v308, %v538
          %v540 = vpop.f32.mrb[0].mxu0
          %v541 = vadd.f32 %v304, %v540
          %v542 = vpop.f32.mrb[0].mxu0
          %v543 = vadd.f32 %v308, %v542
          %544 = vmatprep.mubr.bf16.mxu0 0
          %545 = vmatmul.mubr.bf16.gmra.mrb[0].mxu0 %v350
          %v546 = vpop.f32.mrb[0].mxu0
          %v547 = vadd.f32 %v304, %v546
          %v548 = vpop.f32.mrb[0].mxu0
          %v549 = vadd.f32 %v308, %v548
          %v550 = vpop.f32.mrb[0].mxu0
          %v551 = vadd.f32 %v304, %v550
          %v552 = vpop.f32.mrb[0].mxu0
          %v553 = vadd.f32 %v308, %v552
          %554 = vmatprep.mubr.bf16.mxu0 0
          %555 = vmatmul.mubr.bf16.gmra.mrb[0].mxu0 %v351
          %v556 = vpop.f32.mrb[0].mxu0
          %v557 = vadd.f32 %v304, %v556
          %v558 = vpop.f32.mrb[0].mxu0
          %v559 = vadd.f32 %v308, %v558
          %v560 = vpop.f32.mrb[0].mxu0
          %v561 = vadd.f32 %v304, %v560
          %v562 = vpop.f32.mrb[0].mxu0
          %v563 = vadd.f32 %v308, %v562
          %564 = vmatprep.mubr.bf16.mxu0 0
          %565 = vmatmul.mubr.bf16.gmra.mrb[0].mxu0 %v352
          %v566 = vpop.f32.mrb[0].mxu0
          %v567 = vadd.f32 %v304, %v566
          %v568 = vpop.f32.mrb[0].mxu0
          %v569 = vadd.f32 %v308, %v568
          %v570 = vpop.f32.mrb[0].mxu0
          %v571 = vadd.f32 %v304, %v570
          %v572 = vpop.f32.mrb[0].mxu0
          %v573 = vadd.f32 %v308, %v572
          %574 = vmatprep.mubr.bf16.mxu0 0
          %575 = vmatmul.mubr.bf16.gmra.mrb[0].mxu0 %v353
          %v576 = vpop.f32.mrb[0].mxu0
          %v577 = vadd.f32 %v304, %v576
          %v578 = vpop.f32.mrb[0].mxu0
          %v579 = vadd.f32 %v308, %v578
          %v580 = vpop.f32.mrb[0].mxu0
          %v581 = vadd.f32 %v304, %v580
          %v582 = vpop.f32.mrb[0].mxu0
          %v583 = vadd.f32 %v308, %v582
          %584 = vmatprep.mubr.bf16.mxu0 0
          %585 = vmatmul.mubr.bf16.gmra.mrb[0].mxu0 %v354
          %v586 = vpop.f32.mrb[0].mxu0
          %v587 = vadd.f32 %v304, %v586
          %v588 = vpop.f32.mrb[0].mxu0
          %v589 = vadd.f32 %v308, %v588
          %v590 = vpop.f32.mrb[0].mxu0
          %v591 = vadd.f32 %v304, %v590
          %v592 = vpop.f32.mrb[0].mxu0
          %v593 = vadd.f32 %v308, %v592
          %594 = vmatprep.mubr.bf16.mxu0 0
          %595 = vmatmul.mubr.bf16.gmra.mrb[0].mxu0 %v355
          %v596 = vpop.f32.mrb[0].mxu0
          %v597 = vadd.f32 %v304, %v596
          %v598 = vpop.f32.mrb[0].mxu0
          %v599 = vadd.f32 %v308, %v598
          %v600 = vpop.f32.mrb[0].mxu0
          %v601 = vadd.f32 %v304, %v600
          %v602 = vpop.f32.mrb[0].mxu0
          %v603 = vadd.f32 %v308, %v602
          %604 = vdwg.mxu0
          %605 = vmatprep.subr.bf16.mxu0 0
          %606 = vmatpush1.bf16.msra.mxu0 %v446
          %607 = vmatprep.subr.bf16.mxu0 0
          %608 = vmatpush1.bf16.msra.mxu0 %v449
          %609 = vmatprep.subr.bf16.mxu0 0
          %610 = vmatpush1.bf16.msra.mxu0 %v452
          %611 = vmatprep.subr.bf16.mxu0 0
          %612 = vmatpush1.bf16.msra.mxu0 %v455
          %613 = vmatprep.subr.bf16.mxu0 0
          %614 = vmatpush1.bf16.msra.mxu0 %v458
          %615 = vmatprep.subr.bf16.mxu0 0
          %616 = vmatpush1.bf16.msra.mxu0 %v461
          %617 = vmatprep.subr.bf16.mxu0 0
          %618 = vmatpush1.bf16.msra.mxu0 %v464
          %619 = vmatprep.subr.bf16.mxu0 0
          %620 = vmatpush1.bf16.msra.mxu0 %v467
          %621 = vmatprep.subr.bf16.mxu0 0
          %622 = vmatpush1.bf16.msra.mxu0 0
          %623 = vmatprep.subr.bf16.mxu0 0
          %624 = vmatpush1.bf16.msra.mxu0 0
          %625 = vmatprep.subr.bf16.mxu0 0
          %626 = vmatpush1.bf16.msra.mxu0 0
          %627 = vmatprep.subr.bf16.mxu0 0
          %628 = vmatpush1.bf16.msra.mxu0 0
          %629 = vmatprep.subr.bf16.mxu0 0
          %630 = vmatpush1.bf16.msra.mxu0 0
          %631 = vmatprep.subr.bf16.mxu0 0
          %632 = vmatpush1.bf16.msra.mxu0 0
          %633 = vmatprep.subr.bf16.mxu0 0
          %634 = vmatpush1.bf16.msra.mxu0 0
          %635 = vmatprep.subr.bf16.mxu0 0
          %636 = vmatpush1.bf16.msra.mxu0 0
          %637 = vmatprep.mubr.bf16.mxu0 0
          %638 = vmatmul.mubr.bf16.gmra.mrb[0].mxu0 %v348
          %v639 = vpop.f32.mrb[0].mxu0
          %v640 = vadd.f32 %v312, %v639
          %v641 = vpop.f32.mrb[0].mxu0
          %v642 = vpop.f32.mrb[0].mxu0
          %v643 = vadd.f32 %v312, %v642
          %v644 = vpop.f32.mrb[0].mxu0
          %645 = vmatprep.mubr.bf16.mxu0 0
          %646 = vmatmul.mubr.bf16.gmra.mrb[0].mxu0 %v349
          %v647 = vpop.f32.mrb[0].mxu0
          %v648 = vadd.f32 %v312, %v647
          %v649 = vpop.f32.mrb[0].mxu0
          %v650 = vpop.f32.mrb[0].mxu0
          %v651 = vadd.f32 %v312, %v650
          %v652 = vpop.f32.mrb[0].mxu0
          %653 = vmatprep.mubr.bf16.mxu0 0
          %654 = vmatmul.mubr.bf16.gmra.mrb[0].mxu0 %v350
          %v655 = vpop.f32.mrb[0].mxu0
          %v656 = vadd.f32 %v312, %v655
          %v657 = vpop.f32.mrb[0].mxu0
          %v658 = vpop.f32.mrb[0].mxu0
          %v659 = vadd.f32 %v312, %v658
          %v660 = vpop.f32.mrb[0].mxu0
          %661 = vmatprep.mubr.bf16.mxu0 0
          %662 = vmatmul.mubr.bf16.gmra.mrb[0].mxu0 %v351
          %v663 = vpop.f32.mrb[0].mxu0
          %v664 = vadd.f32 %v312, %v663
          %v665 = vpop.f32.mrb[0].mxu0
          %v666 = vpop.f32.mrb[0].mxu0
          %v667 = vadd.f32 %v312, %v666
          %v668 = vpop.f32.mrb[0].mxu0
          %669 = vmatprep.mubr.bf16.mxu0 0
          %670 = vmatmul.mubr.bf16.gmra.mrb[0].mxu0 %v352
          %v671 = vpop.f32.mrb[0].mxu0
          %v672 = vadd.f32 %v312, %v671
          %v673 = vpop.f32.mrb[0].mxu0
          %v674 = vpop.f32.mrb[0].mxu0
          %v675 = vadd.f32 %v312, %v674
          %v676 = vpop.f32.mrb[0].mxu0
          %677 = vmatprep.mubr.bf16.mxu0 0
          %678 = vmatmul.mubr.bf16.gmra.mrb[0].mxu0 %v353
          %v679 = vpop.f32.mrb[0].mxu0
          %v680 = vadd.f32 %v312, %v679
          %v681 = vpop.f32.mrb[0].mxu0
          %v682 = vpop.f32.mrb[0].mxu0
          %v683 = vadd.f32 %v312, %v682
          %v684 = vpop.f32.mrb[0].mxu0
          %685 = vmatprep.mubr.bf16.mxu0 0
          %686 = vmatmul.mubr.bf16.gmra.mrb[0].mxu0 %v354
          %v687 = vpop.f32.mrb[0].mxu0
          %v688 = vadd.f32 %v312, %v687
          %v689 = vpop.f32.mrb[0].mxu0
          %v690 = vpop.f32.mrb[0].mxu0
          %v691 = vadd.f32 %v312, %v690
          %v692 = vpop.f32.mrb[0].mxu0
          %693 = vmatprep.mubr.bf16.mxu0 0
          %694 = vmatmul.mubr.bf16.gmra.mrb[0].mxu0 %v355
          %v695 = vpop.f32.mrb[0].mxu0
          %v696 = vadd.f32 %v312, %v695
          %v697 = vpop.f32.mrb[0].mxu0
          %v698 = vpop.f32.mrb[0].mxu0
          %v699 = vadd.f32 %v312, %v698
          %v700 = vpop.f32.mrb[0].mxu0
          %701 = vdwg.mxu0
          %v702 = vpack.c.bf16 %v531, %v527
          %v703 = vpack.c.bf16 %v533, %v529
          %v704 = vpack.c.bf16 %v643, %v640
          %v705 = vpack.c.bf16 %v541, %v537
          %v706 = vpack.c.bf16 %v543, %v539
          %v707 = vpack.c.bf16 %v651, %v648
          %v708 = vpack.c.bf16 %v551, %v547
          %v709 = vpack.c.bf16 %v553, %v549
          %v710 = vpack.c.bf16 %v659, %v656
          %v711 = vpack.c.bf16 %v561, %v557
          %v712 = vpack.c.bf16 %v563, %v559
          %v713 = vpack.c.bf16 %v667, %v664
          %v714 = vpack.c.bf16 %v571, %v567
          %v715 = vpack.c.bf16 %v573, %v569
          %v716 = vpack.c.bf16 %v675, %v672
          %v717 = vpack.c.bf16 %v581, %v577
          %v718 = vpack.c.bf16 %v583, %v579
          %v719 = vpack.c.bf16 %v683, %v680
          %v720 = vpack.c.bf16 %v591, %v587
          %v721 = vpack.c.bf16 %v593, %v589
          %v722 = vpack.c.bf16 %v691, %v688
          %v723 = vpack.c.bf16 %v601, %v597
          %v724 = vpack.c.bf16 %v603, %v599
          %v725 = vpack.c.bf16 %v699, %v696
          %726 = vst [vmem:[#allocation2] sm:$0xff] %v702
          %727 = vst [vmem:[#allocation2 + $0x8] sm:$0xff] %v703
          %728 = vst [vmem:[#allocation2 + $0x10] sm:$0xff] %v704
          %729 = vst [vmem:[#allocation2 + $0x18] sm:$0xff] %v705
          %730 = vst [vmem:[#allocation2 + $0x20] sm:$0xff] %v706
          %731 = vst [vmem:[#allocation2 + $0x28] sm:$0xff] %v707
          %732 = vst [vmem:[#allocation2 + $0x30] sm:$0xff] %v708
          %733 = vst [vmem:[#allocation2 + $0x38] sm:$0xff] %v709
          %734 = vst [vmem:[#allocation2 + $0x40] sm:$0xff] %v710
          %735 = vst [vmem:[#allocation2 + $0x48] sm:$0xff] %v711
          %736 = vst [vmem:[#allocation2 + $0x50] sm:$0xff] %v712
          %737 = vst [vmem:[#allocation2 + $0x58] sm:$0xff] %v713
          %738 = vst [vmem:[#allocation2 + $0x60] sm:$0xff] %v714
          %739 = vst [vmem:[#allocation2 + $0x68] sm:$0xff] %v715
          %740 = vst [vmem:[#allocation2 + $0x70] sm:$0xff] %v716
          %741 = vst [vmem:[#allocation2 + $0x78] sm:$0xff] %v717
          %742 = vst [vmem:[#allocation2 + $0x80] sm:$0xff] %v718
          %743 = vst [vmem:[#allocation2 + $0x88] sm:$0xff] %v719
          %744 = vst [vmem:[#allocation2 + $0x90] sm:$0xff] %v720
          %745 = vst [vmem:[#allocation2 + $0x98] sm:$0xff] %v721
          %746 = vst [vmem:[#allocation2 + $0xa0] sm:$0xff] %v722
          %747 = vst [vmem:[#allocation2 + $0xa8] sm:$0xff] %v723
          %748 = vst [vmem:[#allocation2 + $0xb0] sm:$0xff] %v724
          %749 = vst [vmem:[#allocation2 + $0xb8] sm:$0xff] %v725
        $region48: #{tpu_custom_call.1} parent=35 // pred_fallthru
          _
        %s750 = smul.u32 %s27, 128
        %s751 = sshra.s32 %s750, 4
        %s752 = sand.u32 %s750, 15
        %s753 = smul.u32 %s751, 3
        %s754 = smul.addr %s753, 8
        %s755 = scalar_lea.vmem [#allocation2], %s754
        %v756 = vld [vmem:[%s755] sm:$0xff]
        %v757 = vld [vmem:[%s755 + $0x18] sm:$0xff]
        %v758 = vld [vmem:[%s755 + $0x30] sm:$0xff]
        %v759 = vld [vmem:[%s755 + $0x48] sm:$0xff]
        %v760 = vld [vmem:[%s755 + $0x60] sm:$0xff]
        %v761 = vld [vmem:[%s755 + $0x78] sm:$0xff]
        %v762 = vld [vmem:[%s755 + $0x90] sm:$0xff]
        %v763 = vld [vmem:[%s755 + $0xa8] sm:$0xff]
        %v764 = vld [vmem:[#allocation2 + $0x8] sm:$0xff]
        %v765 = vld [vmem:[#allocation2 + $0x20] sm:$0xff]
        %v766 = vld [vmem:[#allocation2 + $0x38] sm:$0xff]
        %v767 = vld [vmem:[#allocation2 + $0x50] sm:$0xff]
        %v768 = vld [vmem:[#allocation2 + $0x68] sm:$0xff]
        %v769 = vld [vmem:[#allocation2 + $0x80] sm:$0xff]
        %v770 = vld [vmem:[#allocation2 + $0x98] sm:$0xff]
        %v771 = vld [vmem:[#allocation2 + $0xb0] sm:$0xff]
        %v772 = vld [vmem:[#allocation2 + $0x10] sm:$0xff]
        %v773 = vld [vmem:[#allocation2 + $0x28] sm:$0xff]
        %v774 = vld [vmem:[#allocation2 + $0x40] sm:$0xff]
        %v775 = vld [vmem:[#allocation2 + $0x58] sm:$0xff]
        %v776 = vld [vmem:[#allocation2 + $0x70] sm:$0xff]
        %v777 = vld [vmem:[#allocation2 + $0x88] sm:$0xff]
        %v778 = vld [vmem:[#allocation2 + $0xa0] sm:$0xff]
        %v779 = vld [vmem:[#allocation2 + $0xb8] sm:$0xff]
        %v780 = vld [vmem:[%s3] sm:$0x1]
        %v782 = vlaneseq
        %v783 = vshrl.u32 %v782, 7
        %v784 = vsub.s32 0, %v783
        %v785 = vrot.slane %v780, %v784
        %787 = vmatprep.subr.bf16.mxu0 0
        %788 = vmatpush1.bf16.xpose.msra.mxu0 %v764
        %789 = vmatprep.subr.bf16.mxu0 0
        %790 = vmatpush1.bf16.xpose.msra.mxu0 %v765
        %791 = vmatprep.subr.bf16.mxu0 0
        %792 = vmatpush1.bf16.xpose.msra.mxu0 %v766
        %793 = vmatprep.subr.bf16.mxu0 0
        %794 = vmatpush1.bf16.xpose.msra.mxu0 %v767
        %795 = vmatprep.subr.bf16.mxu0 0
        %796 = vmatpush1.bf16.xpose.msra.mxu0 %v768
        %797 = vmatprep.subr.bf16.mxu0 0
        %798 = vmatpush1.bf16.xpose.msra.mxu0 %v769
        %799 = vmatprep.subr.bf16.mxu0 0
        %800 = vmatpush1.bf16.xpose.msra.mxu0 %v770
        %801 = vmatprep.subr.bf16.mxu0 0
        %802 = vmatpush1.bf16.xpose.msra.mxu0 %v771
        %803 = vmatprep.subr.bf16.mxu0 0
        %804 = vmatpush1.bf16.xpose.msra.mxu0 0
        %805 = vmatprep.subr.bf16.mxu0 0
        %806 = vmatpush1.bf16.xpose.msra.mxu0 0
        %807 = vmatprep.subr.bf16.mxu0 0
        %808 = vmatpush1.bf16.xpose.msra.mxu0 0
        %809 = vmatprep.subr.bf16.mxu0 0
        %810 = vmatpush1.bf16.xpose.msra.mxu0 0
        %811 = vmatprep.subr.bf16.mxu0 0
        %812 = vmatpush1.bf16.xpose.msra.mxu0 0
        %813 = vmatprep.subr.bf16.mxu0 0
        %814 = vmatpush1.bf16.xpose.msra.mxu0 0
        %815 = vmatprep.subr.bf16.mxu0 0
        %816 = vmatpush1.bf16.xpose.msra.mxu0 0
        %817 = vmatprep.subr.bf16.mxu0 0
        %818 = vmatpush1.bf16.xpose.msra.mxu0 0
        %819 = vmatprep.mubr.bf16.mxu0 0
        %820 = vmatmul.mubr.bf16.gmra.mrb[0].mxu0 %v756
        %v821 = vpop.f32.mrb[0].mxu0
        %v822 = vadd.f32 %v785, %v821
        %v823 = vpop.f32.mrb[0].mxu0
        %v824 = vpop.f32.mrb[0].mxu0
        %v825 = vadd.f32 %v785, %v824
        %v826 = vpop.f32.mrb[0].mxu0
        %827 = vmatprep.mubr.bf16.mxu0 0
        %828 = vmatmul.mubr.bf16.gmra.mrb[0].mxu0 %v757
        %v829 = vpop.f32.mrb[0].mxu0
        %v830 = vadd.f32 %v785, %v829
        %v831 = vpop.f32.mrb[0].mxu0
        %v832 = vpop.f32.mrb[0].mxu0
        %v833 = vadd.f32 %v785, %v832
        %v834 = vpop.f32.mrb[0].mxu0
        %835 = vmatprep.mubr.bf16.mxu0 0
        %836 = vmatmul.mubr.bf16.gmra.mrb[0].mxu0 %v758
        %v837 = vpop.f32.mrb[0].mxu0
        %v838 = vadd.f32 %v785, %v837
        %v839 = vpop.f32.mrb[0].mxu0
        %v840 = vpop.f32.mrb[0].mxu0
        %v841 = vadd.f32 %v785, %v840
        %v842 = vpop.f32.mrb[0].mxu0
        %843 = vmatprep.mubr.bf16.mxu0 0
        %844 = vmatmul.mubr.bf16.gmra.mrb[0].mxu0 %v759
        %v845 = vpop.f32.mrb[0].mxu0
        %v846 = vadd.f32 %v785, %v845
        %v847 = vpop.f32.mrb[0].mxu0
        %v848 = vpop.f32.mrb[0].mxu0
        %v849 = vadd.f32 %v785, %v848
        %v850 = vpop.f32.mrb[0].mxu0
        %851 = vmatprep.mubr.bf16.mxu0 0
        %852 = vmatmul.mubr.bf16.gmra.mrb[0].mxu0 %v760
        %v853 = vpop.f32.mrb[0].mxu0
        %v854 = vadd.f32 %v785, %v853
        %v855 = vpop.f32.mrb[0].mxu0
        %v856 = vpop.f32.mrb[0].mxu0
        %v857 = vadd.f32 %v785, %v856
        %v858 = vpop.f32.mrb[0].mxu0
        %859 = vmatprep.mubr.bf16.mxu0 0
        %860 = vmatmul.mubr.bf16.gmra.mrb[0].mxu0 %v761
        %v861 = vpop.f32.mrb[0].mxu0
        %v862 = vadd.f32 %v785, %v861
        %v863 = vpop.f32.mrb[0].mxu0
        %v864 = vpop.f32.mrb[0].mxu0
        %v865 = vadd.f32 %v785, %v864
        %v866 = vpop.f32.mrb[0].mxu0
        %867 = vmatprep.mubr.bf16.mxu0 0
        %868 = vmatmul.mubr.bf16.gmra.mrb[0].mxu0 %v762
        %v869 = vpop.f32.mrb[0].mxu0
        %v870 = vadd.f32 %v785, %v869
        %v871 = vpop.f32.mrb[0].mxu0
        %v872 = vpop.f32.mrb[0].mxu0
        %v873 = vadd.f32 %v785, %v872
        %v874 = vpop.f32.mrb[0].mxu0
        %875 = vmatprep.mubr.bf16.mxu0 0
        %876 = vmatmul.mubr.bf16.gmra.mrb[0].mxu0 %v763
        %v877 = vpop.f32.mrb[0].mxu0
        %v878 = vadd.f32 %v785, %v877
        %v879 = vpop.f32.mrb[0].mxu0
        %v880 = vpop.f32.mrb[0].mxu0
        %v881 = vadd.f32 %v785, %v880
        %v882 = vpop.f32.mrb[0].mxu0
        %883 = vdwg.mxu0
        %884 = vmax.xlane.f32.xlu0 %v822
        %v885 = vpop.xlane.xlu0 %884
        %886 = vmax.xlane.f32.xlu0 %v825
        %v887 = vpop.xlane.xlu0 %886
        %888 = vmax.xlane.f32.xlu0 %v830
        %v889 = vpop.xlane.xlu0 %888
        %890 = vmax.xlane.f32.xlu0 %v833
        %v891 = vpop.xlane.xlu0 %890
        %892 = vmax.xlane.f32.xlu0 %v838
        %v893 = vpop.xlane.xlu0 %892
        %894 = vmax.xlane.f32.xlu0 %v841
        %v895 = vpop.xlane.xlu0 %894
        %896 = vmax.xlane.f32.xlu0 %v846
        %v897 = vpop.xlane.xlu0 %896
        %898 = vmax.xlane.f32.xlu0 %v849
        %v899 = vpop.xlane.xlu0 %898
        %900 = vmax.xlane.f32.xlu0 %v854
        %v901 = vpop.xlane.xlu0 %900
        %902 = vmax.xlane.f32.xlu0 %v857
        %v903 = vpop.xlane.xlu0 %902
        %904 = vmax.xlane.f32.xlu0 %v862
        %v905 = vpop.xlane.xlu0 %904
        %906 = vmax.xlane.f32.xlu0 %v865
        %v907 = vpop.xlane.xlu0 %906
        %908 = vmax.xlane.f32.xlu0 %v870
        %v909 = vpop.xlane.xlu0 %908
        %910 = vmax.xlane.f32.xlu0 %v873
        %v911 = vpop.xlane.xlu0 %910
        %912 = vmax.xlane.f32.xlu0 %v878
        %v913 = vpop.xlane.xlu0 %912
        %914 = vmax.xlane.f32.xlu0 %v881
        %v915 = vpop.xlane.xlu0 %914
        %v916 = vsub.f32 %v822, %v885
        %v917 = vsub.f32 %v825, %v887
        %v918 = vsub.f32 %v830, %v889
        %v919 = vsub.f32 %v833, %v891
        %v920 = vsub.f32 %v838, %v893
        %v921 = vsub.f32 %v841, %v895
        %v922 = vsub.f32 %v846, %v897
        %v923 = vsub.f32 %v849, %v899
        %v924 = vsub.f32 %v854, %v901
        %v925 = vsub.f32 %v857, %v903
        %v926 = vsub.f32 %v862, %v905
        %v927 = vsub.f32 %v865, %v907
        %v928 = vsub.f32 %v870, %v909
        %v929 = vsub.f32 %v873, %v911
        %v930 = vsub.f32 %v878, %v913
        %v931 = vsub.f32 %v881, %v915
        %v932 = vmul.f32 %v916, 1.442695
        %v933 = vpow.pop %v932
        %v934 = vmul.f32 %v917, 1.442695
        %v935 = vpow.pop %v934
        %v936 = vmul.f32 %v918, 1.442695
        %v937 = vpow.pop %v936
        %v938 = vmul.f32 %v919, 1.442695
        %v939 = vpow.pop %v938
        %v940 = vmul.f32 %v920, 1.442695
        %v941 = vpow.pop %v940
        %v942 = vmul.f32 %v921, 1.442695
        %v943 = vpow.pop %v942
        %v944 = vmul.f32 %v922, 1.442695
        %v945 = vpow.pop %v944
        %v946 = vmul.f32 %v923, 1.442695
        %v947 = vpow.pop %v946
        %v948 = vmul.f32 %v924, 1.442695
        %v949 = vpow.pop %v948
        %v950 = vmul.f32 %v925, 1.442695
        %v951 = vpow.pop %v950
        %v952 = vmul.f32 %v926, 1.442695
        %v953 = vpow.pop %v952
        %v954 = vmul.f32 %v927, 1.442695
        %v955 = vpow.pop %v954
        %v956 = vmul.f32 %v928, 1.442695
        %v957 = vpow.pop %v956
        %v958 = vmul.f32 %v929, 1.442695
        %v959 = vpow.pop %v958
        %v960 = vmul.f32 %v930, 1.442695
        %v961 = vpow.pop %v960
        %v962 = vmul.f32 %v931, 1.442695
        %v963 = vpow.pop %v962
        %964 = vadd.xlane.f32.xlu0 %v933
        %v965 = vpop.xlane.xlu0 %964
        %966 = vadd.xlane.f32.xlu0 %v935
        %v967 = vpop.xlane.xlu0 %966
        %968 = vadd.xlane.f32.xlu0 %v937
        %v969 = vpop.xlane.xlu0 %968
        %970 = vadd.xlane.f32.xlu0 %v939
        %v971 = vpop.xlane.xlu0 %970
        %972 = vadd.xlane.f32.xlu0 %v941
        %v973 = vpop.xlane.xlu0 %972
        %974 = vadd.xlane.f32.xlu0 %v943
        %v975 = vpop.xlane.xlu0 %974
        %976 = vadd.xlane.f32.xlu0 %v945
        %v977 = vpop.xlane.xlu0 %976
        %978 = vadd.xlane.f32.xlu0 %v947
        %v979 = vpop.xlane.xlu0 %978
        %980 = vadd.xlane.f32.xlu0 %v949
        %v981 = vpop.xlane.xlu0 %980
        %982 = vadd.xlane.f32.xlu0 %v951
        %v983 = vpop.xlane.xlu0 %982
        %984 = vadd.xlane.f32.xlu0 %v953
        %v985 = vpop.xlane.xlu0 %984
        %986 = vadd.xlane.f32.xlu0 %v955
        %v987 = vpop.xlane.xlu0 %986
        %988 = vadd.xlane.f32.xlu0 %v957
        %v989 = vpop.xlane.xlu0 %988
        %990 = vadd.xlane.f32.xlu0 %v959
        %v991 = vpop.xlane.xlu0 %990
        %992 = vadd.xlane.f32.xlu0 %v961
        %v993 = vpop.xlane.xlu0 %992
        %994 = vadd.xlane.f32.xlu0 %v963
        %v995 = vpop.xlane.xlu0 %994
        %v996 = vpack.c.bf16 %v935, %v933
        %v997 = vpack.c.bf16 %v939, %v937
        %v998 = vpack.c.bf16 %v943, %v941
        %v999 = vpack.c.bf16 %v947, %v945
        %v1000 = vpack.c.bf16 %v951, %v949
        %v1001 = vpack.c.bf16 %v955, %v953
        %v1002 = vpack.c.bf16 %v959, %v957
        %v1003 = vpack.c.bf16 %v963, %v961
        %1004 = vmatprep.subr.bf16.mxu0 0
        %1005 = vmatpush1.bf16.msra.mxu0 %v772
        %1006 = vmatprep.subr.bf16.mxu0 0
        %1007 = vmatpush1.bf16.msra.mxu0 %v773
        %1008 = vmatprep.subr.bf16.mxu0 0
        %1009 = vmatpush1.bf16.msra.mxu0 %v774
        %1010 = vmatprep.subr.bf16.mxu0 0
        %1011 = vmatpush1.bf16.msra.mxu0 %v775
        %1012 = vmatprep.subr.bf16.mxu0 0
        %1013 = vmatpush1.bf16.msra.mxu0 %v776
        %1014 = vmatprep.subr.bf16.mxu0 0
        %1015 = vmatpush1.bf16.msra.mxu0 %v777
        %1016 = vmatprep.subr.bf16.mxu0 0
        %1017 = vmatpush1.bf16.msra.mxu0 %v778
        %1018 = vmatprep.subr.bf16.mxu0 0
        %1019 = vmatpush1.bf16.msra.mxu0 %v779
        %1020 = vmatprep.subr.bf16.mxu0 0
        %1021 = vmatpush1.bf16.msra.mxu0 0
        %1022 = vmatprep.subr.bf16.mxu0 0
        %1023 = vmatpush1.bf16.msra.mxu0 0
        %1024 = vmatprep.subr.bf16.mxu0 0
        %1025 = vmatpush1.bf16.msra.mxu0 0
        %1026 = vmatprep.subr.bf16.mxu0 0
        %1027 = vmatpush1.bf16.msra.mxu0 0
        %1028 = vmatprep.subr.bf16.mxu0 0
        %1029 = vmatpush1.bf16.msra.mxu0 0
        %1030 = vmatprep.subr.bf16.mxu0 0
        %1031 = vmatpush1.bf16.msra.mxu0 0
        %1032 = vmatprep.subr.bf16.mxu0 0
        %1033 = vmatpush1.bf16.msra.mxu0 0
        %1034 = vmatprep.subr.bf16.mxu0 0
        %1035 = vmatpush1.bf16.msra.mxu0 0
        %1036 = vmatprep.mubr.bf16.mxu0 0
        %1037 = vmatmul.mubr.bf16.gmra.mrb[0].mxu0 %v996
        %v1038 = vpop.f32.mrb[0].mxu0
        %v1039 = vadd.f32 0.0, %v1038
        %v1040 = vpop.f32.mrb[0].mxu0
        %v1041 = vpop.f32.mrb[0].mxu0
        %v1042 = vadd.f32 0.0, %v1041
        %v1043 = vpop.f32.mrb[0].mxu0
        %1044 = vmatprep.mubr.bf16.mxu0 0
        %1045 = vmatmul.mubr.bf16.gmra.mrb[0].mxu0 %v997
        %v1046 = vpop.f32.mrb[0].mxu0
        %v1047 = vadd.f32 0.0, %v1046
        %v1048 = vpop.f32.mrb[0].mxu0
        %v1049 = vpop.f32.mrb[0].mxu0
        %v1050 = vadd.f32 0.0, %v1049
        %v1051 = vpop.f32.mrb[0].mxu0
        %1052 = vmatprep.mubr.bf16.mxu0 0
        %1053 = vmatmul.mubr.bf16.gmra.mrb[0].mxu0 %v998
        %v1054 = vpop.f32.mrb[0].mxu0
        %v1055 = vadd.f32 0.0, %v1054
        %v1056 = vpop.f32.mrb[0].mxu0
        %v1057 = vpop.f32.mrb[0].mxu0
        %v1058 = vadd.f32 0.0, %v1057
        %v1059 = vpop.f32.mrb[0].mxu0
        %1060 = vmatprep.mubr.bf16.mxu0 0
        %1061 = vmatmul.mubr.bf16.gmra.mrb[0].mxu0 %v999
        %v1062 = vpop.f32.mrb[0].mxu0
        %v1063 = vadd.f32 0.0, %v1062
        %v1064 = vpop.f32.mrb[0].mxu0
        %v1065 = vpop.f32.mrb[0].mxu0
        %v1066 = vadd.f32 0.0, %v1065
        %v1067 = vpop.f32.mrb[0].mxu0
        %1068 = vmatprep.mubr.bf16.mxu0 0
        %1069 = vmatmul.mubr.bf16.gmra.mrb[0].mxu0 %v1000
        %v1070 = vpop.f32.mrb[0].mxu0
        %v1071 = vadd.f32 0.0, %v1070
        %v1072 = vpop.f32.mrb[0].mxu0
        %v1073 = vpop.f32.mrb[0].mxu0
        %v1074 = vadd.f32 0.0, %v1073
        %v1075 = vpop.f32.mrb[0].mxu0
        %1076 = vmatprep.mubr.bf16.mxu0 0
        %1077 = vmatmul.mubr.bf16.gmra.mrb[0].mxu0 %v1001
        %v1078 = vpop.f32.mrb[0].mxu0
        %v1079 = vadd.f32 0.0, %v1078
        %v1080 = vpop.f32.mrb[0].mxu0
        %v1081 = vpop.f32.mrb[0].mxu0
        %v1082 = vadd.f32 0.0, %v1081
        %v1083 = vpop.f32.mrb[0].mxu0
        %1084 = vmatprep.mubr.bf16.mxu0 0
        %1085 = vmatmul.mubr.bf16.gmra.mrb[0].mxu0 %v1002
        %v1086 = vpop.f32.mrb[0].mxu0
        %v1087 = vadd.f32 0.0, %v1086
        %v1088 = vpop.f32.mrb[0].mxu0
        %v1089 = vpop.f32.mrb[0].mxu0
        %v1090 = vadd.f32 0.0, %v1089
        %v1091 = vpop.f32.mrb[0].mxu0
        %1092 = vmatprep.mubr.bf16.mxu0 0
        %1093 = vmatmul.mubr.bf16.gmra.mrb[0].mxu0 %v1003
        %v1094 = vpop.f32.mrb[0].mxu0
        %v1095 = vadd.f32 0.0, %v1094
        %v1096 = vpop.f32.mrb[0].mxu0
        %v1097 = vpop.f32.mrb[0].mxu0
        %v1098 = vadd.f32 0.0, %v1097
        %v1099 = vpop.f32.mrb[0].mxu0
        %1100 = vdwg.mxu0
        %v1101 = vrcp.pop %v965
        %v1102 = vrcp.pop %v967
        %v1103 = vrcp.pop %v969
        %v1104 = vrcp.pop %v971
        %v1105 = vrcp.pop %v973
        %v1106 = vrcp.pop %v975
        %v1107 = vrcp.pop %v977
        %v1108 = vrcp.pop %v979
        %v1109 = vrcp.pop %v981
        %v1110 = vrcp.pop %v983
        %v1111 = vrcp.pop %v985
        %v1112 = vrcp.pop %v987
        %v1113 = vrcp.pop %v989
        %v1114 = vrcp.pop %v991
        %v1115 = vrcp.pop %v993
        %v1116 = vrcp.pop %v995
        %v1117 = vmul.f32 %v1039, %v1101
        %v1118 = vmul.f32 %v1042, %v1102
        %v1119 = vmul.f32 %v1047, %v1103
        %v1120 = vmul.f32 %v1050, %v1104
        %v1121 = vmul.f32 %v1055, %v1105
        %v1122 = vmul.f32 %v1058, %v1106
        %v1123 = vmul.f32 %v1063, %v1107
        %v1124 = vmul.f32 %v1066, %v1108
        %v1125 = vmul.f32 %v1071, %v1109
        %v1126 = vmul.f32 %v1074, %v1110
        %v1127 = vmul.f32 %v1079, %v1111
        %v1128 = vmul.f32 %v1082, %v1112
        %v1129 = vmul.f32 %v1087, %v1113
        %v1130 = vmul.f32 %v1090, %v1114
        %v1131 = vmul.f32 %v1095, %v1115
        %v1132 = vmul.f32 %v1098, %v1116
        %1133 = vst [vmem:[%s244] sm:$0xff] %v1117
        %1134 = vst [vmem:[%s244 + $0x8] sm:$0xff] %v1118
        %1135 = vst [vmem:[%s244 + $0x10] sm:$0xff] %v1119
        %1136 = vst [vmem:[%s244 + $0x18] sm:$0xff] %v1120
        %1137 = vst [vmem:[%s244 + $0x20] sm:$0xff] %v1121
        %1138 = vst [vmem:[%s244 + $0x28] sm:$0xff] %v1122
        %1139 = vst [vmem:[%s244 + $0x30] sm:$0xff] %v1123
        %1140 = vst [vmem:[%s244 + $0x38] sm:$0xff] %v1124
        %1141 = vst [vmem:[%s244 + $0x40] sm:$0xff] %v1125
        %1142 = vst [vmem:[%s244 + $0x48] sm:$0xff] %v1126
        %1143 = vst [vmem:[%s244 + $0x50] sm:$0xff] %v1127
        %1144 = vst [vmem:[%s244 + $0x58] sm:$0xff] %v1128
        %1145 = vst [vmem:[%s244 + $0x60] sm:$0xff] %v1129
        %1146 = vst [vmem:[%s244 + $0x68] sm:$0xff] %v1130
        %1147 = vst [vmem:[%s244 + $0x70] sm:$0xff] %v1131
        %1148 = vst [vmem:[%s244 + $0x78] sm:$0xff] %v1132
        %s1149 = sand.u32 %s133, 1
        %s1150 = scalar_lea.sflag [#allocation5], %s1149
        %s1151 = sand.u32 %s133, 1
        %s1152 = smul.addr %s1151, 128
        %s1153 = scalar_lea.vmem [#allocation8], %s1152
        // Predicated region
        $region49: #{tpu_custom_call.1} parent=35 // pred_check
          %p1154 = pneg %p143
        $region50: #{tpu_custom_call.1} parent=35 // pred_check_branch
          %1156 = sbr.rel (%p1154) target = $region52
        $region51: #{tpu_custom_call.1} parent=35 // pred_region
          %s1157 = smul.u32 16, %s27
          %s1159 = ssub.s32 2048, 2048
          %1160 = vsyncadd %s1150, %s1159
          %s1161 = smul.addr %s26, 16
          %s1162 = sadd.s32 %s1157, %s1161
          %s1163 = smul.addr %s1162, 128
          %s1164 = scalar_lea.hbm %s4, %s1163
          %s1165 = sshll.u32 %s1153, 4
          %s1166 = int_to_ptr.vmem [resolvable:$true] %s1165
          %1171 = dma.vmem_to_hbm [thread:$0]  %s1166, 2048, %s1164, %s1150, 128, 128, 8
        $region52: #{tpu_custom_call.1} parent=35 // pred_fallthru
          _
      $region36: #{tpu_custom_call.1} parent=5 // pred_fallthru
        _
      %p1172 = scmp.le.s32.totalorder 2, %s17
      // Predicated region
      $region53: #{tpu_custom_call.1} parent=5 // pred_check
        %p1173 = pneg %p1172
      $region54: #{tpu_custom_call.1} parent=5 // pred_check_branch
        %1175 = sbr.rel (%p1173) target = $region56
      $region55: #{tpu_custom_call.1} parent=5 // pred_region
        %s1176 = ssub.s32 %s17, 2
        // Predicated region
        $region57: #{tpu_custom_call.1} parent=55 // pred_check
          %p1177 = pneg %p149
        $region58: #{tpu_custom_call.1} parent=55 // pred_check_branch
          %1179 = sbr.rel (%p1177) target = $region60
        $region59: #{tpu_custom_call.1} parent=55 // pred_region
          %s1180 = sand.u32 %s134, 1
          %s1181 = scalar_lea.sflag [#allocation5], %s1180
          %s1182 = sand.u32 %s134, 1
          %s1183 = smul.addr %s1182, 128
          %s1184 = scalar_lea.vmem [#allocation8], %s1183
          %1185 = dma.done %s1181, 2048
        $region60: #{tpu_custom_call.1} parent=55 // pred_fallthru
          _
      $region56: #{tpu_custom_call.1} parent=5 // pred_fallthru
        _
    $region6: #{tpu_custom_call.1} parent=1 // loop_footer
      %s21 = sadd.s32 1, %s17
    $region7: #{tpu_custom_call.1} parent=1 // loop_footer_branch
      %16 = sbr.rel target = $region3
    $region8: #{tpu_custom_call.1} parent=1 // loop_exit
      _
    %1186 = vsyncpa [#allocation4], 1
    %s1187 = scalar_lea.sflag [#allocation4], 1
    %1188 = vsyncpa %s1187, 1
    %1189 = vsyncpa [#allocation7], 1
    %1190 = vsyncpa [#allocation5], 1
    %s1191 = scalar_lea.sflag [#allocation5], 1
    %1192 = vsyncpa %s1191, 1

</llo_original>
